<compile_context>
chip_gen: v5e
topology: v5e:2x2
jax: 0.10.0
libtpu: 0.0.40
codegen_flags: <defaults>
</compile_context>

<pallas_src>
import functools
import jax
import jax.numpy as jnp
from jax.experimental import pallas as pl
from jax.experimental.pallas import tpu as pltpu

PADDED_DIM = 128     # lane-dense padded feature width for h / bundle / MLP activations
IN_PAD = 384         # 300 -> 3*128 lane-dense embedding input width


# ---------------------------------------------------------------------------
# Fused GraphNet forward kernel (one grid step == one graph)
# ---------------------------------------------------------------------------
def _graphnet_fused_kernel(node_feat_ref, adj_ref, emb_w_ref, emb_b_ref,
                           lwh_ref, lwc_ref, lb_ref, lscale_ref, lshift_ref,
                           w1_ref, b1_ref, w2_ref, b2_ref, w3_ref, b3_ref,
                           out_ref, *, n_layers, mxu_dtype):
    f32 = jnp.float32

    def mm(a, b):
        # mxu_dtype=f32 keeps exact reference numerics; bf16 cuts MXU passes on v6e/v7x.
        return jnp.dot(a.astype(mxu_dtype), b.astype(mxu_dtype),
                       preferred_element_type=f32)

    # embedding_h (+ identity in_feat_dropout); padded input cols / weight rows are 0
    h = mm(node_feat_ref[...], emb_w_ref[...]) + emb_b_ref[...]          # (N, HP)

    adj = adj_ref[...]                                                   # (N, N)
    for l in range(n_layers):  # static trip count -> unrolled at trace time
        # mean aggregation over incoming neighbors: c = A_norm @ h
        c = mm(adj, h)
        # NodeApply Linear(2H -> O) on [h, c], as two dots (no concat slab in VMEM)
        bundle = mm(h, lwh_ref[l]) + mm(c, lwc_ref[l]) + lb_ref[l]
        # F.normalize(p=2, dim=1, eps=1e-12): rsqrt on EUP; padded lanes contribute 0
        sumsq = jnp.sum(bundle * bundle, axis=-1, keepdims=True)
        bundle = bundle * jax.lax.rsqrt(jnp.maximum(sumsq, 1e-24))
        # activation = relu
        bundle = jnp.maximum(bundle, 0.0)
        # BatchNorm1d (eval), pre-folded into scale/shift (padded lanes: 0, 0)
        bundle = bundle * lscale_ref[l] + lshift_ref[l]
        # residual (in_dim == out_dim); layer dropout + net dropout = identity (eval)
        h = h + bundle

    # 'mean' readout over the graph's nodes (all N rows are real nodes)
    hg = jnp.mean(h, axis=0, keepdims=True)                              # (1, HP)

    # MLPReadout: out_dim -> out_dim//2 -> out_dim//4 -> n_classes (relu between)
    y = jnp.maximum(mm(hg, w1_ref[...]) + b1_ref[...], 0.0)
    y = jnp.maximum(mm(y, w2_ref[...]) + b2_ref[...], 0.0)
    out_ref[...] = mm(y, w3_ref[...]) + b3_ref[...]                      # (1, HP)


def graphnet_forward(node_feat, adj_norm, packed, *, n_layers, n_classes,
                     mxu_dtype=jnp.float32):
    """node_feat: (B, N, IN_PAD) f32 ; adj_norm: (B, N, N) f32 ; packed: weight dict."""
    hp = PADDED_DIM
    batch, n_nodes, in_pad = node_feat.shape

    kernel = functools.partial(_graphnet_fused_kernel,
                               n_layers=n_layers, mxu_dtype=mxu_dtype)

    weights = (packed["emb_w"], packed["emb_b"],
               packed["lwh"], packed["lwc"], packed["lb"],
               packed["lscale"], packed["lshift"],
               packed["w1"], packed["b1"], packed["w2"], packed["b2"],
               packed["w3"], packed["b3"])

    def per_graph_spec(shape):
        # (B, d0, d1) -> block (1, d0, d1), batch dim squeezed out of the kernel ref
        return pl.BlockSpec((None,) + tuple(shape[1:]),
                            lambda b: (b,) + (0,) * (len(shape) - 1))

    def resident_spec(a):
        # full array, constant index_map -> stays VMEM-resident across the grid
        return pl.BlockSpec(a.shape, lambda b: (0,) * a.ndim)

    in_specs = ([per_graph_spec(node_feat.shape), per_graph_spec(adj_norm.shape)]
                + [resident_spec(a) for a in weights])

    # Advisory cost estimate so XLA schedules the call tightly within the jit.
    flops_per_graph = (2 * n_nodes * in_pad * hp
                       + n_layers * (2 * n_nodes * n_nodes * hp + 4 * n_nodes * hp * hp)
                       + 3 * 2 * hp * hp)
    cost = pl.CostEstimate(
        flops=int(batch * flops_per_graph),
        transcendentals=int(batch * n_layers * n_nodes),
        bytes_accessed=int(4 * (node_feat.size + adj_norm.size + batch * hp
                                + sum(int(w.size) for w in weights))),
    )

    out_padded = pl.pallas_call(
        kernel,
        out_shape=jax.ShapeDtypeStruct((batch, 1, hp), jnp.float32),
        grid=(batch,),
        in_specs=in_specs,
        out_specs=pl.BlockSpec((None, 1, hp), lambda b: (b, 0, 0)),
        compiler_params=pltpu.CompilerParams(
            dimension_semantics=("parallel",)),   # shards graphs across v7x's 2 TCs
        cost_estimate=cost,
    )(node_feat, adj_norm, *weights)
    return out_padded[:, 0, :n_classes]


# ---------------------------------------------------------------------------
# Parameter construction (deterministic, synthetic) + lane-dense packing
# ---------------------------------------------------------------------------
def init_params(key, in_dim_node, hidden_dim, out_dim, n_classes, n_layers):
    keys = jax.random.split(key, 16)
    k_it = iter(keys)

    def lin(k, d_in, d_out, scale=0.05):
        kw, kb = jax.random.split(k)
        w = jax.random.normal(kw, (d_in, d_out), jnp.float32) * scale
        b = jax.random.normal(kb, (1, d_out), jnp.float32) * scale
        return w, b

    params = {}
    params["emb_h_w"], params["emb_h_b"] = lin(next(k_it), in_dim_node, hidden_dim)

    layers = []
    dims = [hidden_dim] * (n_layers - 1) + [out_dim]
    d_in = hidden_dim
    for d_out in dims:
        w_full, b = lin(next(k_it), 2 * d_in, d_out)   # NodeApply Linear(2*in -> out)
        layers.append({
            "w": w_full, "b": b,
            "gamma": jnp.ones((1, d_out), jnp.float32),
            "beta": jnp.zeros((1, d_out), jnp.float32),
            "rmean": jnp.zeros((1, d_out), jnp.float32),
            "rvar": jnp.ones((1, d_out), jnp.float32),
        })
        d_in = d_out
    params["layers"] = layers

    mlp = {}
    mlp["w1"], mlp["b1"] = lin(next(k_it), out_dim, out_dim // 2)
    mlp["w2"], mlp["b2"] = lin(next(k_it), out_dim // 2, out_dim // 4)
    mlp["w3"], mlp["b3"] = lin(next(k_it), out_dim // 4, n_classes)
    params["mlp"] = mlp
    return params


def pack_params(params, hp=PADDED_DIM, in_pad=IN_PAD):
    """Zero-pad all feature dims to `hp` lanes (embedding K to `in_pad`), split the
    NodeApply Linear(2H->O) weight into h/c halves, and pre-fold BatchNorm (eval)."""

    def pad2(a, rows, cols):
        out = jnp.zeros((rows, cols), jnp.float32)
        return out.at[:a.shape[0], :a.shape[1]].set(a)

    packed = {
        "emb_w": pad2(params["emb_h_w"], in_pad, hp),   # (384, 128)
        "emb_b": pad2(params["emb_h_b"], 1, hp),
    }

    lwh, lwc, lb, lsc, lsh = [], [], [], [], []
    for lp in params["layers"]:
        d_in = lp["w"].shape[0] // 2
        lwh.append(pad2(lp["w"][:d_in], hp, hp))         # h-part of Linear(2H->O)
        lwc.append(pad2(lp["w"][d_in:], hp, hp))         # c-part
        lb.append(pad2(lp["b"], 1, hp))
        scale = lp["gamma"] * jax.lax.rsqrt(lp["rvar"] + 1e-5)   # BN eval fold
        shift = lp["beta"] - lp["rmean"] * scale
        lsc.append(pad2(scale, 1, hp))                    # padded lanes -> 0
        lsh.append(pad2(shift, 1, hp))                    # padded lanes -> 0
    packed["lwh"] = jnp.stack(lwh)        # (L, HP, HP)
    packed["lwc"] = jnp.stack(lwc)        # (L, HP, HP)
    packed["lb"] = jnp.stack(lb)          # (L, 1, HP)
    packed["lscale"] = jnp.stack(lsc)
    packed["lshift"] = jnp.stack(lsh)

    mlp = params["mlp"]
    packed["w1"] = pad2(mlp["w1"], hp, hp)
    packed["b1"] = pad2(mlp["b1"], 1, hp)
    packed["w2"] = pad2(mlp["w2"], hp, hp)
    packed["b2"] = pad2(mlp["b2"], 1, hp)
    packed["w3"] = pad2(mlp["w3"], hp, hp)
    packed["b3"] = pad2(mlp["b3"], 1, hp)
    return packed


# ---------------------------------------------------------------------------
# Main
# ---------------------------------------------------------------------------
if __name__ == "__main__":
    IN_DIM_NODE = 300
    HIDDEN = 32
    OUT_DIM = 32
    N_CLASSES = 15
    N_LAYERS = 2
    N_NODES = 16
    N_EDGES = 24
    BATCH = 8           # graphs per call, mapped to a "parallel" grid axis

    key = jax.random.PRNGKey(0)
    k_feat, k_edge, k_src, k_dst, k_param = jax.random.split(key, 5)

    # node features, zero-padded 300 -> 384 cols (lane-dense embedding dot)
    node_feat = jax.random.normal(k_feat, (BATCH, N_NODES, IN_DIM_NODE), jnp.float32)
    node_feat_p = jnp.zeros((BATCH, N_NODES, IN_PAD), jnp.float32)
    node_feat_p = node_feat_p.at[:, :, :IN_DIM_NODE].set(node_feat)

    # edge features exist in the reference graph, but embedding_e's output is never
    # used downstream in the reference forward -> dead code, dropped from the kernel.
    edge_feat = jax.random.normal(k_edge, (BATCH, N_EDGES), jnp.float32)  # noqa: F841

    # deterministic random directed graphs; mean-aggregator adjacency (row-normalized)
    src = jax.random.randint(k_src, (BATCH, N_EDGES), 0, N_NODES)
    dst = jax.random.randint(k_dst, (BATCH, N_EDGES), 0, N_NODES)
    bidx = jnp.broadcast_to(jnp.arange(BATCH)[:, None], (BATCH, N_EDGES))
    adj = jnp.zeros((BATCH, N_NODES, N_NODES), jnp.float32).at[bidx, dst, src].add(1.0)
    in_deg = jnp.sum(adj, axis=-1, keepdims=True)
    adj_norm = adj / jnp.maximum(in_deg, 1.0)   # zero-in-degree rows -> 0 (DGL mean behaviour)

    params = init_params(k_param, IN_DIM_NODE, HIDDEN, OUT_DIM, N_CLASSES, N_LAYERS)
    packed = pack_params(params)

    fwd = jax.jit(functools.partial(graphnet_forward,
                                    n_layers=N_LAYERS, n_classes=N_CLASSES,
                                    mxu_dtype=jnp.float32))  # bf16 on v6e/v7x if drift OK
    out = fwd(node_feat_p, adj_norm, packed)
    out = jax.block_until_ready(out)
    assert out.shape == (BATCH, N_CLASSES)
    assert bool(jnp.all(jnp.isfinite(out)))
    print("KERNEL_OK")
</pallas_src>

<mosaic_0001>
module attributes {stable_mosaic.version = 11 : i64} {
  func.func @_graphnet_fused_kernel(%arg0: i32, %arg1: memref<1x16x384xf32, #tpu.memory_space<vmem>>, %arg2: memref<1x16x16xf32, #tpu.memory_space<vmem>>, %arg3: memref<384x128xf32, #tpu.memory_space<vmem>>, %arg4: memref<1x128xf32, #tpu.memory_space<vmem>>, %arg5: memref<2x128x128xf32, #tpu.memory_space<vmem>>, %arg6: memref<2x128x128xf32, #tpu.memory_space<vmem>>, %arg7: memref<2x1x128xf32, #tpu.memory_space<vmem>>, %arg8: memref<2x1x128xf32, #tpu.memory_space<vmem>>, %arg9: memref<2x1x128xf32, #tpu.memory_space<vmem>>, %arg10: memref<128x128xf32, #tpu.memory_space<vmem>>, %arg11: memref<1x128xf32, #tpu.memory_space<vmem>>, %arg12: memref<128x128xf32, #tpu.memory_space<vmem>>, %arg13: memref<1x128xf32, #tpu.memory_space<vmem>>, %arg14: memref<128x128xf32, #tpu.memory_space<vmem>>, %arg15: memref<1x128xf32, #tpu.memory_space<vmem>>, %arg16: memref<1x1x128xf32, #tpu.memory_space<vmem>>) attributes {dimension_semantics = [#tpu.dimension_semantics<parallel>], iteration_bounds = array<i64: 8>, scalar_prefetch = 0 : i64, scratch_operands = 0 : i64, tpu.core_type = #tpu.core_type<tc>, window_params = [{transform_indices = @transform_0, window_bounds = array<i64: 1, 16, 384>}, {transform_indices = @transform_1, window_bounds = array<i64: 1, 16, 16>}, {pipeline_mode = #tpu.pipeline_mode<synchronous>, transform_indices = @transform_2, window_bounds = array<i64: 384, 128>}, {pipeline_mode = #tpu.pipeline_mode<synchronous>, transform_indices = @transform_3, window_bounds = array<i64: 1, 128>}, {pipeline_mode = #tpu.pipeline_mode<synchronous>, transform_indices = @transform_4, window_bounds = array<i64: 2, 128, 128>}, {pipeline_mode = #tpu.pipeline_mode<synchronous>, transform_indices = @transform_5, window_bounds = array<i64: 2, 128, 128>}, {pipeline_mode = #tpu.pipeline_mode<synchronous>, transform_indices = @transform_6, window_bounds = array<i64: 2, 1, 128>}, {pipeline_mode = #tpu.pipeline_mode<synchronous>, transform_indices = @transform_7, window_bounds = array<i64: 2, 1, 128>}, {pipeline_mode = #tpu.pipeline_mode<synchronous>, transform_indices = @transform_8, window_bounds = array<i64: 2, 1, 128>}, {pipeline_mode = #tpu.pipeline_mode<synchronous>, transform_indices = @transform_9, window_bounds = array<i64: 128, 128>}, {pipeline_mode = #tpu.pipeline_mode<synchronous>, transform_indices = @transform_10, window_bounds = array<i64: 1, 128>}, {pipeline_mode = #tpu.pipeline_mode<synchronous>, transform_indices = @transform_11, window_bounds = array<i64: 128, 128>}, {pipeline_mode = #tpu.pipeline_mode<synchronous>, transform_indices = @transform_12, window_bounds = array<i64: 1, 128>}, {pipeline_mode = #tpu.pipeline_mode<synchronous>, transform_indices = @transform_13, window_bounds = array<i64: 128, 128>}, {pipeline_mode = #tpu.pipeline_mode<synchronous>, transform_indices = @transform_14, window_bounds = array<i64: 1, 128>}, {transform_indices = @transform_15, window_bounds = array<i64: 1, 1, 128>}]} {
    %c0 = arith.constant 0 : index
    %c0_0 = arith.constant 0 : index
    %c0_1 = arith.constant 0 : index
    %0 = vector.load %arg1[%c0, %c0_0, %c0_1] : memref<1x16x384xf32, #tpu.memory_space<vmem>>, vector<1x16x384xf32>
    %1 = vector.shape_cast %0 : vector<1x16x384xf32> to vector<16x384xf32>
    %c0_2 = arith.constant 0 : index
    %c0_3 = arith.constant 0 : index
    %2 = vector.load %arg3[%c0_2, %c0_3] : memref<384x128xf32, #tpu.memory_space<vmem>>, vector<384x128xf32>
    %cst = arith.constant dense<0.000000e+00> : vector<16x128xf32>
    %3 = tpu.matmul %1, %2, %cst {dimension_numbers = #tpu.dot_dimension_numbers<[1], [0], [0], [1], [0, 0, 1, 1], [], []>} : vector<16x384xf32>, vector<384x128xf32>, vector<16x128xf32> -> vector<16x128xf32>
    %c0_4 = arith.constant 0 : index
    %c0_5 = arith.constant 0 : index
    %4 = vector.load %arg4[%c0_4, %c0_5] : memref<1x128xf32, #tpu.memory_space<vmem>>, vector<1x128xf32>
    %5 = vector.broadcast %4 : vector<1x128xf32> to vector<16x128xf32>
    %6 = arith.addf %3, %5 : vector<16x128xf32>
    %c0_6 = arith.constant 0 : index
    %c0_7 = arith.constant 0 : index
    %c0_8 = arith.constant 0 : index
    %7 = vector.load %arg2[%c0_6, %c0_7, %c0_8] : memref<1x16x16xf32, #tpu.memory_space<vmem>>, vector<1x16x16xf32>
    %8 = vector.shape_cast %7 : vector<1x16x16xf32> to vector<16x16xf32>
    %cst_9 = arith.constant dense<0.000000e+00> : vector<16x128xf32>
    %9 = tpu.matmul %8, %6, %cst_9 {dimension_numbers = #tpu.dot_dimension_numbers<[1], [0], [0], [1], [0, 0, 1, 1], [], []>} : vector<16x16xf32>, vector<16x128xf32>, vector<16x128xf32> -> vector<16x128xf32>
    %c0_10 = arith.constant 0 : index
    %c0_11 = arith.constant 0 : index
    %c0_12 = arith.constant 0 : index
    %10 = vector.load %arg5[%c0_10, %c0_11, %c0_12] : memref<2x128x128xf32, #tpu.memory_space<vmem>>, vector<1x128x128xf32>
    %11 = vector.shape_cast %10 : vector<1x128x128xf32> to vector<128x128xf32>
    %cst_13 = arith.constant dense<0.000000e+00> : vector<16x128xf32>
    %12 = tpu.matmul %6, %11, %cst_13 {dimension_numbers = #tpu.dot_dimension_numbers<[1], [0], [0], [1], [0, 0, 1, 1], [], []>} : vector<16x128xf32>, vector<128x128xf32>, vector<16x128xf32> -> vector<16x128xf32>
    %c0_14 = arith.constant 0 : index
    %c0_15 = arith.constant 0 : index
    %c0_16 = arith.constant 0 : index
    %13 = vector.load %arg6[%c0_14, %c0_15, %c0_16] : memref<2x128x128xf32, #tpu.memory_space<vmem>>, vector<1x128x128xf32>
    %14 = vector.shape_cast %13 : vector<1x128x128xf32> to vector<128x128xf32>
    %cst_17 = arith.constant dense<0.000000e+00> : vector<16x128xf32>
    %15 = tpu.matmul %9, %14, %cst_17 {dimension_numbers = #tpu.dot_dimension_numbers<[1], [0], [0], [1], [0, 0, 1, 1], [], []>} : vector<16x128xf32>, vector<128x128xf32>, vector<16x128xf32> -> vector<16x128xf32>
    %16 = arith.addf %12, %15 : vector<16x128xf32>
    %c0_18 = arith.constant 0 : index
    %c0_19 = arith.constant 0 : index
    %c0_20 = arith.constant 0 : index
    %17 = vector.load %arg7[%c0_18, %c0_19, %c0_20] : memref<2x1x128xf32, #tpu.memory_space<vmem>>, vector<1x1x128xf32>
    %18 = vector.shape_cast %17 : vector<1x1x128xf32> to vector<1x128xf32>
    %19 = vector.broadcast %18 : vector<1x128xf32> to vector<16x128xf32>
    %20 = arith.addf %16, %19 : vector<16x128xf32>
    %21 = arith.mulf %20, %20 : vector<16x128xf32>
    %cst_21 = arith.constant dense<0.000000e+00> : vector<16xf32>
    %22 = vector.multi_reduction <add>, %21, %cst_21 [1] : vector<16x128xf32> to vector<16xf32>
    %23 = vector.shape_cast %22 : vector<16xf32> to vector<16x1xf32>
    %cst_22 = arith.constant 1.000000e-24 : f32
    %24 = vector.broadcast %cst_22 : f32 to vector<16x1xf32>
    %25 = arith.maximumf %23, %24 : vector<16x1xf32>
    %26 = math.rsqrt %25 : vector<16x1xf32>
    %27 = vector.broadcast %26 : vector<16x1xf32> to vector<16x128xf32>
    %28 = arith.mulf %20, %27 : vector<16x128xf32>
    %cst_23 = arith.constant 0.000000e+00 : f32
    %29 = vector.broadcast %cst_23 : f32 to vector<16x128xf32>
    %30 = arith.maximumf %28, %29 : vector<16x128xf32>
    %c0_24 = arith.constant 0 : index
    %c0_25 = arith.constant 0 : index
    %c0_26 = arith.constant 0 : index
    %31 = vector.load %arg8[%c0_24, %c0_25, %c0_26] : memref<2x1x128xf32, #tpu.memory_space<vmem>>, vector<1x1x128xf32>
    %32 = vector.shape_cast %31 : vector<1x1x128xf32> to vector<1x128xf32>
    %33 = vector.broadcast %32 : vector<1x128xf32> to vector<16x128xf32>
    %34 = arith.mulf %30, %33 : vector<16x128xf32>
    %c0_27 = arith.constant 0 : index
    %c0_28 = arith.constant 0 : index
    %c0_29 = arith.constant 0 : index
    %35 = vector.load %arg9[%c0_27, %c0_28, %c0_29] : memref<2x1x128xf32, #tpu.memory_space<vmem>>, vector<1x1x128xf32>
    %36 = vector.shape_cast %35 : vector<1x1x128xf32> to vector<1x128xf32>
    %37 = vector.broadcast %36 : vector<1x128xf32> to vector<16x128xf32>
    %38 = arith.addf %34, %37 : vector<16x128xf32>
    %39 = arith.addf %6, %38 : vector<16x128xf32>
    %cst_30 = arith.constant dense<0.000000e+00> : vector<16x128xf32>
    %40 = tpu.matmul %8, %39, %cst_30 {dimension_numbers = #tpu.dot_dimension_numbers<[1], [0], [0], [1], [0, 0, 1, 1], [], []>} : vector<16x16xf32>, vector<16x128xf32>, vector<16x128xf32> -> vector<16x128xf32>
    %c1 = arith.constant 1 : index
    %c0_31 = arith.constant 0 : index
    %c0_32 = arith.constant 0 : index
    %41 = vector.load %arg5[%c1, %c0_31, %c0_32] : memref<2x128x128xf32, #tpu.memory_space<vmem>>, vector<1x128x128xf32>
    %42 = vector.shape_cast %41 : vector<1x128x128xf32> to vector<128x128xf32>
    %cst_33 = arith.constant dense<0.000000e+00> : vector<16x128xf32>
    %43 = tpu.matmul %39, %42, %cst_33 {dimension_numbers = #tpu.dot_dimension_numbers<[1], [0], [0], [1], [0, 0, 1, 1], [], []>} : vector<16x128xf32>, vector<128x128xf32>, vector<16x128xf32> -> vector<16x128xf32>
    %c1_34 = arith.constant 1 : index
    %c0_35 = arith.constant 0 : index
    %c0_36 = arith.constant 0 : index
    %44 = vector.load %arg6[%c1_34, %c0_35, %c0_36] : memref<2x128x128xf32, #tpu.memory_space<vmem>>, vector<1x128x128xf32>
    %45 = vector.shape_cast %44 : vector<1x128x128xf32> to vector<128x128xf32>
    %cst_37 = arith.constant dense<0.000000e+00> : vector<16x128xf32>
    %46 = tpu.matmul %40, %45, %cst_37 {dimension_numbers = #tpu.dot_dimension_numbers<[1], [0], [0], [1], [0, 0, 1, 1], [], []>} : vector<16x128xf32>, vector<128x128xf32>, vector<16x128xf32> -> vector<16x128xf32>
    %47 = arith.addf %43, %46 : vector<16x128xf32>
    %c1_38 = arith.constant 1 : index
    %c0_39 = arith.constant 0 : index
    %c0_40 = arith.constant 0 : index
    %48 = vector.load %arg7[%c1_38, %c0_39, %c0_40] : memref<2x1x128xf32, #tpu.memory_space<vmem>>, vector<1x1x128xf32>
    %49 = vector.shape_cast %48 : vector<1x1x128xf32> to vector<1x128xf32>
    %50 = vector.broadcast %49 : vector<1x128xf32> to vector<16x128xf32>
    %51 = arith.addf %47, %50 : vector<16x128xf32>
    %52 = arith.mulf %51, %51 : vector<16x128xf32>
    %cst_41 = arith.constant dense<0.000000e+00> : vector<16xf32>
    %53 = vector.multi_reduction <add>, %52, %cst_41 [1] : vector<16x128xf32> to vector<16xf32>
    %54 = vector.shape_cast %53 : vector<16xf32> to vector<16x1xf32>
    %cst_42 = arith.constant 1.000000e-24 : f32
    %55 = vector.broadcast %cst_42 : f32 to vector<16x1xf32>
    %56 = arith.maximumf %54, %55 : vector<16x1xf32>
    %57 = math.rsqrt %56 : vector<16x1xf32>
    %58 = vector.broadcast %57 : vector<16x1xf32> to vector<16x128xf32>
    %59 = arith.mulf %51, %58 : vector<16x128xf32>
    %cst_43 = arith.constant 0.000000e+00 : f32
    %60 = vector.broadcast %cst_43 : f32 to vector<16x128xf32>
    %61 = arith.maximumf %59, %60 : vector<16x128xf32>
    %c1_44 = arith.constant 1 : index
    %c0_45 = arith.constant 0 : index
    %c0_46 = arith.constant 0 : index
    %62 = vector.load %arg8[%c1_44, %c0_45, %c0_46] : memref<2x1x128xf32, #tpu.memory_space<vmem>>, vector<1x1x128xf32>
    %63 = vector.shape_cast %62 : vector<1x1x128xf32> to vector<1x128xf32>
    %64 = vector.broadcast %63 : vector<1x128xf32> to vector<16x128xf32>
    %65 = arith.mulf %61, %64 : vector<16x128xf32>
    %c1_47 = arith.constant 1 : index
    %c0_48 = arith.constant 0 : index
    %c0_49 = arith.constant 0 : index
    %66 = vector.load %arg9[%c1_47, %c0_48, %c0_49] : memref<2x1x128xf32, #tpu.memory_space<vmem>>, vector<1x1x128xf32>
    %67 = vector.shape_cast %66 : vector<1x1x128xf32> to vector<1x128xf32>
    %68 = vector.broadcast %67 : vector<1x128xf32> to vector<16x128xf32>
    %69 = arith.addf %65, %68 : vector<16x128xf32>
    %70 = arith.addf %39, %69 : vector<16x128xf32>
    %cst_50 = arith.constant dense<0.000000e+00> : vector<128xf32>
    %71 = vector.multi_reduction <add>, %70, %cst_50 [0] : vector<16x128xf32> to vector<128xf32>
    %72 = vector.shape_cast %71 : vector<128xf32> to vector<1x128xf32>
    %cst_51 = arith.constant 1.600000e+01 : f32
    %73 = vector.broadcast %cst_51 : f32 to vector<1x128xf32>
    %74 = arith.divf %72, %73 : vector<1x128xf32>
    %c0_52 = arith.constant 0 : index
    %c0_53 = arith.constant 0 : index
    %75 = vector.load %arg10[%c0_52, %c0_53] : memref<128x128xf32, #tpu.memory_space<vmem>>, vector<128x128xf32>
    %cst_54 = arith.constant dense<0.000000e+00> : vector<1x128xf32>
    %76 = tpu.matmul %74, %75, %cst_54 {dimension_numbers = #tpu.dot_dimension_numbers<[1], [0], [0], [1], [0, 0, 1, 1], [], []>} : vector<1x128xf32>, vector<128x128xf32>, vector<1x128xf32> -> vector<1x128xf32>
    %c0_55 = arith.constant 0 : index
    %c0_56 = arith.constant 0 : index
    %77 = vector.load %arg11[%c0_55, %c0_56] : memref<1x128xf32, #tpu.memory_space<vmem>>, vector<1x128xf32>
    %78 = arith.addf %76, %77 : vector<1x128xf32>
    %cst_57 = arith.constant 0.000000e+00 : f32
    %79 = vector.broadcast %cst_57 : f32 to vector<1x128xf32>
    %80 = arith.maximumf %78, %79 : vector<1x128xf32>
    %c0_58 = arith.constant 0 : index
    %c0_59 = arith.constant 0 : index
    %81 = vector.load %arg12[%c0_58, %c0_59] : memref<128x128xf32, #tpu.memory_space<vmem>>, vector<128x128xf32>
    %cst_60 = arith.constant dense<0.000000e+00> : vector<1x128xf32>
    %82 = tpu.matmul %80, %81, %cst_60 {dimension_numbers = #tpu.dot_dimension_numbers<[1], [0], [0], [1], [0, 0, 1, 1], [], []>} : vector<1x128xf32>, vector<128x128xf32>, vector<1x128xf32> -> vector<1x128xf32>
    %c0_61 = arith.constant 0 : index
    %c0_62 = arith.constant 0 : index
    %83 = vector.load %arg13[%c0_61, %c0_62] : memref<1x128xf32, #tpu.memory_space<vmem>>, vector<1x128xf32>
    %84 = arith.addf %82, %83 : vector<1x128xf32>
    %cst_63 = arith.constant 0.000000e+00 : f32
    %85 = vector.broadcast %cst_63 : f32 to vector<1x128xf32>
    %86 = arith.maximumf %84, %85 : vector<1x128xf32>
    %c0_64 = arith.constant 0 : index
    %c0_65 = arith.constant 0 : index
    %87 = vector.load %arg14[%c0_64, %c0_65] : memref<128x128xf32, #tpu.memory_space<vmem>>, vector<128x128xf32>
    %cst_66 = arith.constant dense<0.000000e+00> : vector<1x128xf32>
    %88 = tpu.matmul %86, %87, %cst_66 {dimension_numbers = #tpu.dot_dimension_numbers<[1], [0], [0], [1], [0, 0, 1, 1], [], []>} : vector<1x128xf32>, vector<128x128xf32>, vector<1x128xf32> -> vector<1x128xf32>
    %c0_67 = arith.constant 0 : index
    %c0_68 = arith.constant 0 : index
    %89 = vector.load %arg15[%c0_67, %c0_68] : memref<1x128xf32, #tpu.memory_space<vmem>>, vector<1x128xf32>
    %90 = arith.addf %88, %89 : vector<1x128xf32>
    %c0_69 = arith.constant 0 : index
    %c0_70 = arith.constant 0 : index
    %c0_71 = arith.constant 0 : index
    %91 = vector.load %arg16[%c0_69, %c0_70, %c0_71] : memref<1x1x128xf32, #tpu.memory_space<vmem>>, vector<1x1x128xf32>
    %92 = vector.shape_cast %91 : vector<1x1x128xf32> to vector<1x128xf32>
    %93 = vector.shape_cast %90 : vector<1x128xf32> to vector<1x1x128xf32>
    tpu.vector_store %arg16[%c0_69, %c0_70, %c0_71], %93 {strides = array<i32>} : memref<1x1x128xf32, #tpu.memory_space<vmem>>, vector<1x1x128xf32>,
    return
  }
  func.func @transform_0(%arg0: i32) -> (i32, i32, i32) {
    %c0_i32 = arith.constant 0 : i32
    %c0_i32_0 = arith.constant 0 : i32
    %c0_i32_1 = arith.constant 0 : i32
    return %arg0, %c0_i32, %c0_i32_0 : i32, i32, i32
  }
  func.func @transform_1(%arg0: i32) -> (i32, i32, i32) {
    %c0_i32 = arith.constant 0 : i32
    %c0_i32_0 = arith.constant 0 : i32
    %c0_i32_1 = arith.constant 0 : i32
    return %arg0, %c0_i32, %c0_i32_0 : i32, i32, i32
  }
  func.func @transform_2(%arg0: i32) -> (i32, i32) {
    %c0_i32 = arith.constant 0 : i32
    %c0_i32_0 = arith.constant 0 : i32
    %c0_i32_1 = arith.constant 0 : i32
    return %c0_i32, %c0_i32_0 : i32, i32
  }
  func.func @transform_3(%arg0: i32) -> (i32, i32) {
    %c0_i32 = arith.constant 0 : i32
    %c0_i32_0 = arith.constant 0 : i32
    %c0_i32_1 = arith.constant 0 : i32
    return %c0_i32, %c0_i32_0 : i32, i32
  }
  func.func @transform_4(%arg0: i32) -> (i32, i32, i32) {
    %c0_i32 = arith.constant 0 : i32
    %c0_i32_0 = arith.constant 0 : i32
    %c0_i32_1 = arith.constant 0 : i32
    %c0_i32_2 = arith.constant 0 : i32
    return %c0_i32, %c0_i32_0, %c0_i32_1 : i32, i32, i32
  }
  func.func @transform_5(%arg0: i32) -> (i32, i32, i32) {
    %c0_i32 = arith.constant 0 : i32
    %c0_i32_0 = arith.constant 0 : i32
    %c0_i32_1 = arith.constant 0 : i32
    %c0_i32_2 = arith.constant 0 : i32
    return %c0_i32, %c0_i32_0, %c0_i32_1 : i32, i32, i32
  }
  func.func @transform_6(%arg0: i32) -> (i32, i32, i32) {
    %c0_i32 = arith.constant 0 : i32
    %c0_i32_0 = arith.constant 0 : i32
    %c0_i32_1 = arith.constant 0 : i32
    %c0_i32_2 = arith.constant 0 : i32
    return %c0_i32, %c0_i32_0, %c0_i32_1 : i32, i32, i32
  }
  func.func @transform_7(%arg0: i32) -> (i32, i32, i32) {
    %c0_i32 = arith.constant 0 : i32
    %c0_i32_0 = arith.constant 0 : i32
    %c0_i32_1 = arith.constant 0 : i32
    %c0_i32_2 = arith.constant 0 : i32
    return %c0_i32, %c0_i32_0, %c0_i32_1 : i32, i32, i32
  }
  func.func @transform_8(%arg0: i32) -> (i32, i32, i32) {
    %c0_i32 = arith.constant 0 : i32
    %c0_i32_0 = arith.constant 0 : i32
    %c0_i32_1 = arith.constant 0 : i32
    %c0_i32_2 = arith.constant 0 : i32
    return %c0_i32, %c0_i32_0, %c0_i32_1 : i32, i32, i32
  }
  func.func @transform_9(%arg0: i32) -> (i32, i32) {
    %c0_i32 = arith.constant 0 : i32
    %c0_i32_0 = arith.constant 0 : i32
    %c0_i32_1 = arith.constant 0 : i32
    return %c0_i32, %c0_i32_0 : i32, i32
  }
  func.func @transform_10(%arg0: i32) -> (i32, i32) {
    %c0_i32 = arith.constant 0 : i32
    %c0_i32_0 = arith.constant 0 : i32
    %c0_i32_1 = arith.constant 0 : i32
    return %c0_i32, %c0_i32_0 : i32, i32
  }
  func.func @transform_11(%arg0: i32) -> (i32, i32) {
    %c0_i32 = arith.constant 0 : i32
    %c0_i32_0 = arith.constant 0 : i32
    %c0_i32_1 = arith.constant 0 : i32
    return %c0_i32, %c0_i32_0 : i32, i32
  }
  func.func @transform_12(%arg0: i32) -> (i32, i32) {
    %c0_i32 = arith.constant 0 : i32
    %c0_i32_0 = arith.constant 0 : i32
    %c0_i32_1 = arith.constant 0 : i32
    return %c0_i32, %c0_i32_0 : i32, i32
  }
  func.func @transform_13(%arg0: i32) -> (i32, i32) {
    %c0_i32 = arith.constant 0 : i32
    %c0_i32_0 = arith.constant 0 : i32
    %c0_i32_1 = arith.constant 0 : i32
    return %c0_i32, %c0_i32_0 : i32, i32
  }
  func.func @transform_14(%arg0: i32) -> (i32, i32) {
    %c0_i32 = arith.constant 0 : i32
    %c0_i32_0 = arith.constant 0 : i32
    %c0_i32_1 = arith.constant 0 : i32
    return %c0_i32, %c0_i32_0 : i32, i32
  }
  func.func @transform_15(%arg0: i32) -> (i32, i32, i32) {
    %c0_i32 = arith.constant 0 : i32
    %c0_i32_0 = arith.constant 0 : i32
    %c0_i32_1 = arith.constant 0 : i32
    return %arg0, %c0_i32, %c0_i32_0 : i32, i32, i32
  }
}

</mosaic_0001>

<llo_original>
// kernel: graphnet_forward.1
$region0: #{graphnet_forward.1}
  #allocation0 [shape = 'u32[]', space=smem, size = 0x4, offset = 0x4, fixed_abs, tag = 'smem constant byte address 0x4 - core index']
  #allocation1 [shape = 'u32[72,128]{1,0:T(1,128)}', space=vmem, size = 0x9000, scoped, tag = 'internal scratch']
  %s0 = inlined_call_operand.hbm [shape: f32[8,16,384], index: 0, kind: input, shape index: {}]
  %s1 = inlined_call_operand.hbm [shape: f32[8,16,16], index: 1, kind: input, shape index: {}]
  %s2 = inlined_call_operand.hbm [shape: f32[384,128], index: 2, kind: input, shape index: {}]
  %s3 = inlined_call_operand.hbm [shape: f32[1,128], index: 3, kind: input, shape index: {}]
  %s4 = inlined_call_operand.hbm [shape: f32[2,128,128], index: 4, kind: input, shape index: {}]
  %s5 = inlined_call_operand.hbm [shape: f32[2,128,128], index: 5, kind: input, shape index: {}]
  %s6 = inlined_call_operand.vmem [shape: f32[2,1,128], index: 6, kind: input, shape index: {}]
  %s7 = inlined_call_operand.vmem [shape: f32[2,1,128], index: 7, kind: input, shape index: {}]
  %s8 = inlined_call_operand.vmem [shape: f32[2,1,128], index: 8, kind: input, shape index: {}]
  %s9 = inlined_call_operand.hbm [shape: f32[128,128], index: 9, kind: input, shape index: {}]
  %s10 = inlined_call_operand.hbm [shape: f32[1,128], index: 10, kind: input, shape index: {}]
  %s11 = inlined_call_operand.hbm [shape: f32[128,128], index: 11, kind: input, shape index: {}]
  %s12 = inlined_call_operand.hbm [shape: f32[1,128], index: 12, kind: input, shape index: {}]
  %s13 = inlined_call_operand.hbm [shape: f32[128,128], index: 13, kind: input, shape index: {}]
  %s14 = inlined_call_operand.hbm [shape: f32[1,128], index: 14, kind: input, shape index: {}]
  %s15 = inlined_call_operand.hbm [shape: f32[8,1,128], index: 15, kind: output, shape index: {}]
  %s16 = sld [smem:[#allocation0]]
  $region141: #{graphnet_forward.1} parent=0
    _
  %s18 = ssub.s32 1, %s16
  %s19 = scalar_select 0, %s18, %s16
  $region1: #{graphnet_forward.1} parent=0
    #allocation2 [shape = 'u8[49152]{0}', space=vmem, size = 0xc000, scoped, tag = 'input window, operand 0']
    #allocation3 [shape = 's32[2]{0}', space=sflag, size = 0x8, scoped, tag = 'scoped memory for graphnet_forward.1']
    #allocation4 [shape = 's32[2]{0}', space=sflag, size = 0x8, scoped, tag = 'scoped memory for graphnet_forward.1']
    #allocation5 [shape = 'u8[16384]{0}', space=vmem, size = 0x4000, scoped, tag = 'input window, operand 1']
    #allocation6 [shape = 's32[2]{0}', space=sflag, size = 0x8, scoped, tag = 'scoped memory for graphnet_forward.1']
    #allocation7 [shape = 'u8[196608]{0}', space=vmem, size = 0x30000, scoped, tag = 'input window, operand 2, single buffered']
    #allocation8 [shape = 'u8[512]{0}', space=vmem, size = 0x400, scoped, tag = 'input window, operand 3, single buffered']
    #allocation9 [shape = 's32[1]{0}', space=sflag, size = 0x4, scoped, tag = 'scoped memory for graphnet_forward.1']
    #allocation10 [shape = 'u8[131072]{0}', space=vmem, size = 0x20000, scoped, tag = 'input window, operand 4, single buffered']
    #allocation11 [shape = 'u8[131072]{0}', space=vmem, size = 0x20000, scoped, tag = 'input window, operand 5, single buffered']
    #allocation12 [shape = 's32[1]{0}', space=sflag, size = 0x4, scoped, tag = 'scoped memory for graphnet_forward.1']
    #allocation13 [shape = 'u8[65536]{0}', space=vmem, size = 0x10000, scoped, tag = 'input window, operand 9, single buffered']
    #allocation14 [shape = 'u8[512]{0}', space=vmem, size = 0x400, scoped, tag = 'input window, operand 10, single buffered']
    #allocation15 [shape = 's32[1]{0}', space=sflag, size = 0x4, scoped, tag = 'scoped memory for graphnet_forward.1']
    #allocation16 [shape = 'u8[65536]{0}', space=vmem, size = 0x10000, scoped, tag = 'input window, operand 11, single buffered']
    #allocation17 [shape = 'u8[512]{0}', space=vmem, size = 0x400, scoped, tag = 'input window, operand 12, single buffered']
    #allocation18 [shape = 's32[1]{0}', space=sflag, size = 0x4, scoped, tag = 'scoped memory for graphnet_forward.1']
    #allocation19 [shape = 'u8[65536]{0}', space=vmem, size = 0x10000, scoped, tag = 'input window, operand 13, single buffered']
    #allocation20 [shape = 'u8[512]{0}', space=vmem, size = 0x400, scoped, tag = 'input window, operand 14, single buffered']
    #allocation21 [shape = 's32[1]{0}', space=sflag, size = 0x4, scoped, tag = 'scoped memory for graphnet_forward.1']
    #allocation22 [shape = 'u8[1024]{0}', space=vmem, size = 0x400, scoped, tag = 'output window, operand 0']
    %20 = vsyncpa [#allocation3], 0
    %s21 = scalar_lea.sflag [#allocation3], 1
    %22 = vsyncpa %s21, 0
    %23 = vsyncpa [#allocation6], 0
    %s24 = scalar_lea.sflag [#allocation6], 1
    %25 = vsyncpa %s24, 0
    %26 = vsyncpa [#allocation9], 0
    %27 = vsyncpa [#allocation12], 0
    %28 = vsyncpa [#allocation15], 0
    %29 = vsyncpa [#allocation18], 0
    %30 = vsyncpa [#allocation21], 0
    %31 = vsyncpa [#allocation4], 0
    %s32 = scalar_lea.sflag [#allocation4], 1
    %33 = vsyncpa %s32, 0
    loop: start=0, step=1, limit=10
    $region2: #{graphnet_forward.1} parent=1 // loop_pre_header
      _
    $region3: #{graphnet_forward.1} parent=1 // loop_header
      %s35 = sphi 0, %s39
      %p36 = scmp.ge.s32.totalorder %s35, 10
      %s45 = sphi 0, %s47
      %s48 = sphi 0, %s45
      %s49 = sphi 0, %s48
      %s65 = sphi 0, %s49
      %s71 = sphi 0, %s73
      %s74 = sphi 0, %s71
      %s75 = sphi 0, %s74
      %s91 = sphi 0, %s75
      %s95 = sphi 0, %s95
      %s97 = sphi 0, %s95
      %s98 = sphi 0, %s97
      %s112 = sphi 0, %s98
      %s116 = sphi 0, %s116
      %s118 = sphi 0, %s116
      %s119 = sphi 0, %s118
      %s133 = sphi 0, %s119
      %s137 = sphi 0, %s137
      %s139 = sphi 0, %s137
      %s140 = sphi 0, %s139
      %s154 = sphi 0, %s140
      %s158 = sphi 0, %s158
      %s160 = sphi 0, %s158
      %s161 = sphi 0, %s160
      %s175 = sphi 0, %s161
      %s179 = sphi 0, %s179
      %s181 = sphi 0, %s179
      %s182 = sphi 0, %s181
      %s196 = sphi 0, %s182
      %s200 = sphi 0, %s200
      %s202 = sphi 0, %s200
      %s203 = sphi 0, %s202
      %s217 = sphi 0, %s203
      %s221 = sphi 0, %s221
      %s223 = sphi 0, %s221
      %s224 = sphi 0, %s223
      %s238 = sphi 0, %s224
      %s242 = sphi 0, %s242
      %s244 = sphi 0, %s242
      %s245 = sphi 0, %s244
      %s259 = sphi 0, %s245
      %s263 = sphi 0, %s263
      %s265 = sphi 0, %s263
      %s266 = sphi 0, %s265
      %s280 = sphi 0, %s266
      %s284 = sphi 0, %s284
      %s286 = sphi 0, %s284
      %s287 = sphi 0, %s286
      %s301 = sphi 0, %s287
      %s305 = sphi 0, %s305
      %s307 = sphi 0, %s305
      %s308 = sphi 0, %s307
      %s322 = sphi 0, %s308
      %s326 = sphi 0, %s326
      %s328 = sphi 0, %s326
      %s329 = sphi 0, %s328
      %s343 = sphi 0, %s329
      %s347 = sphi 0, %s347
      %s349 = sphi 0, %s347
      %s350 = sphi 0, %s349
      %s364 = sphi 0, %s350
      %s370 = sphi 0, %s372
      %s373 = sphi 0, %s370
      %s374 = sphi 0, %s373
      %s390 = sphi 0, %s374
    $region4: #{graphnet_forward.1} parent=1 // loop_header_branch
      %38 = sbr.rel (%p36) target = $region8
    $region5: #{graphnet_forward.1} parent=1 // loop_body
      %s40 = ssub.s32 %s35, 1
      %s41 = ssub.s32 %s35, 2
      %s42 = sadd.s32 %s35, 1
      %s43 = ssub.s32 %s35, %s42
      %p44 = scmp.eq.s32.totalorder %s43, 0
      %s46 = sadd.s32 %s45, 1
      %s47 = scalar_select %p44, %s45, %s46
      %p50 = pneg %p44
      %p51 = scmp.eq.s32.totalorder %s35, 7
      %p52 = por %p50, %p51
      %p53 = scmp.ne.s32.totalorder %s45, %s48
      %p54 = scmp.eq.s32.totalorder %s35, 0
      %p55 = por %p53, %p54
      %p56 = scmp.ne.s32.totalorder %s45, %s48
      %p57 = scmp.eq.s32.totalorder %s40, 7
      %p58 = por %p56, %p57
      %p59 = scmp.ne.s32.totalorder %s48, %s49
      %p60 = scmp.eq.s32.totalorder %s40, 0
      %p61 = por %p59, %p60
      %p62 = scmp.ne.s32.totalorder %s48, %s49
      %p63 = scmp.eq.s32.totalorder %s41, 7
      %p64 = por %p62, %p63
      %p66 = scmp.ne.s32.totalorder %s49, %s65
      %p67 = scmp.eq.s32.totalorder %s41, 0
      %p68 = por %p66, %p67
      %s69 = ssub.s32 %s35, %s42
      %p70 = scmp.eq.s32.totalorder %s69, 0
      %s72 = sadd.s32 %s71, 1
      %s73 = scalar_select %p70, %s71, %s72
      %p76 = pneg %p70
      %p77 = scmp.eq.s32.totalorder %s35, 7
      %p78 = por %p76, %p77
      %p79 = scmp.ne.s32.totalorder %s71, %s74
      %p80 = scmp.eq.s32.totalorder %s35, 0
      %p81 = por %p79, %p80
      %p82 = scmp.ne.s32.totalorder %s71, %s74
      %p83 = scmp.eq.s32.totalorder %s40, 7
      %p84 = por %p82, %p83
      %p85 = scmp.ne.s32.totalorder %s74, %s75
      %p86 = scmp.eq.s32.totalorder %s40, 0
      %p87 = por %p85, %p86
      %p88 = scmp.ne.s32.totalorder %s74, %s75
      %p89 = scmp.eq.s32.totalorder %s41, 7
      %p90 = por %p88, %p89
      %p92 = scmp.ne.s32.totalorder %s75, %s91
      %p93 = scmp.eq.s32.totalorder %s41, 0
      %p94 = por %p92, %p93
      %s96 = sadd.s32 %s95, 1
      %p99 = scmp.eq.s32.totalorder %s35, 7
      %p100 = scmp.ne.s32.totalorder %s95, %s97
      %p101 = scmp.eq.s32.totalorder %s35, 0
      %p102 = por %p100, %p101
      %p103 = scmp.ne.s32.totalorder %s95, %s97
      %p104 = scmp.eq.s32.totalorder %s40, 7
      %p105 = por %p103, %p104
      %p106 = scmp.ne.s32.totalorder %s97, %s98
      %p107 = scmp.eq.s32.totalorder %s40, 0
      %p108 = por %p106, %p107
      %p109 = scmp.ne.s32.totalorder %s97, %s98
      %p110 = scmp.eq.s32.totalorder %s41, 7
      %p111 = por %p109, %p110
      %p113 = scmp.ne.s32.totalorder %s98, %s112
      %p114 = scmp.eq.s32.totalorder %s41, 0
      %p115 = por %p113, %p114
      %s117 = sadd.s32 %s116, 1
      %p120 = scmp.eq.s32.totalorder %s35, 7
      %p121 = scmp.ne.s32.totalorder %s116, %s118
      %p122 = scmp.eq.s32.totalorder %s35, 0
      %p123 = por %p121, %p122
      %p124 = scmp.ne.s32.totalorder %s116, %s118
      %p125 = scmp.eq.s32.totalorder %s40, 7
      %p126 = por %p124, %p125
      %p127 = scmp.ne.s32.totalorder %s118, %s119
      %p128 = scmp.eq.s32.totalorder %s40, 0
      %p129 = por %p127, %p128
      %p130 = scmp.ne.s32.totalorder %s118, %s119
      %p131 = scmp.eq.s32.totalorder %s41, 7
      %p132 = por %p130, %p131
      %p134 = scmp.ne.s32.totalorder %s119, %s133
      %p135 = scmp.eq.s32.totalorder %s41, 0
      %p136 = por %p134, %p135
      %s138 = sadd.s32 %s137, 1
      %p141 = scmp.eq.s32.totalorder %s35, 7
      %p142 = scmp.ne.s32.totalorder %s137, %s139
      %p143 = scmp.eq.s32.totalorder %s35, 0
      %p144 = por %p142, %p143
      %p145 = scmp.ne.s32.totalorder %s137, %s139
      %p146 = scmp.eq.s32.totalorder %s40, 7
      %p147 = por %p145, %p146
      %p148 = scmp.ne.s32.totalorder %s139, %s140
      %p149 = scmp.eq.s32.totalorder %s40, 0
      %p150 = por %p148, %p149
      %p151 = scmp.ne.s32.totalorder %s139, %s140
      %p152 = scmp.eq.s32.totalorder %s41, 7
      %p153 = por %p151, %p152
      %p155 = scmp.ne.s32.totalorder %s140, %s154
      %p156 = scmp.eq.s32.totalorder %s41, 0
      %p157 = por %p155, %p156
      %s159 = sadd.s32 %s158, 1
      %p162 = scmp.eq.s32.totalorder %s35, 7
      %p163 = scmp.ne.s32.totalorder %s158, %s160
      %p164 = scmp.eq.s32.totalorder %s35, 0
      %p165 = por %p163, %p164
      %p166 = scmp.ne.s32.totalorder %s158, %s160
      %p167 = scmp.eq.s32.totalorder %s40, 7
      %p168 = por %p166, %p167
      %p169 = scmp.ne.s32.totalorder %s160, %s161
      %p170 = scmp.eq.s32.totalorder %s40, 0
      %p171 = por %p169, %p170
      %p172 = scmp.ne.s32.totalorder %s160, %s161
      %p173 = scmp.eq.s32.totalorder %s41, 7
      %p174 = por %p172, %p173
      %p176 = scmp.ne.s32.totalorder %s161, %s175
      %p177 = scmp.eq.s32.totalorder %s41, 0
      %p178 = por %p176, %p177
      %s180 = sadd.s32 %s179, 1
      %p183 = scmp.eq.s32.totalorder %s35, 7
      %p184 = scmp.ne.s32.totalorder %s179, %s181
      %p185 = scmp.eq.s32.totalorder %s35, 0
      %p186 = por %p184, %p185
      %p187 = scmp.ne.s32.totalorder %s179, %s181
      %p188 = scmp.eq.s32.totalorder %s40, 7
      %p189 = por %p187, %p188
      %p190 = scmp.ne.s32.totalorder %s181, %s182
      %p191 = scmp.eq.s32.totalorder %s40, 0
      %p192 = por %p190, %p191
      %p193 = scmp.ne.s32.totalorder %s181, %s182
      %p194 = scmp.eq.s32.totalorder %s41, 7
      %p195 = por %p193, %p194
      %p197 = scmp.ne.s32.totalorder %s182, %s196
      %p198 = scmp.eq.s32.totalorder %s41, 0
      %p199 = por %p197, %p198
      %s201 = sadd.s32 %s200, 1
      %p204 = scmp.eq.s32.totalorder %s35, 7
      %p205 = scmp.ne.s32.totalorder %s200, %s202
      %p206 = scmp.eq.s32.totalorder %s35, 0
      %p207 = por %p205, %p206
      %p208 = scmp.ne.s32.totalorder %s200, %s202
      %p209 = scmp.eq.s32.totalorder %s40, 7
      %p210 = por %p208, %p209
      %p211 = scmp.ne.s32.totalorder %s202, %s203
      %p212 = scmp.eq.s32.totalorder %s40, 0
      %p213 = por %p211, %p212
      %p214 = scmp.ne.s32.totalorder %s202, %s203
      %p215 = scmp.eq.s32.totalorder %s41, 7
      %p216 = por %p214, %p215
      %p218 = scmp.ne.s32.totalorder %s203, %s217
      %p219 = scmp.eq.s32.totalorder %s41, 0
      %p220 = por %p218, %p219
      %s222 = sadd.s32 %s221, 1
      %p225 = scmp.eq.s32.totalorder %s35, 7
      %p226 = scmp.ne.s32.totalorder %s221, %s223
      %p227 = scmp.eq.s32.totalorder %s35, 0
      %p228 = por %p226, %p227
      %p229 = scmp.ne.s32.totalorder %s221, %s223
      %p230 = scmp.eq.s32.totalorder %s40, 7
      %p231 = por %p229, %p230
      %p232 = scmp.ne.s32.totalorder %s223, %s224
      %p233 = scmp.eq.s32.totalorder %s40, 0
      %p234 = por %p232, %p233
      %p235 = scmp.ne.s32.totalorder %s223, %s224
      %p236 = scmp.eq.s32.totalorder %s41, 7
      %p237 = por %p235, %p236
      %p239 = scmp.ne.s32.totalorder %s224, %s238
      %p240 = scmp.eq.s32.totalorder %s41, 0
      %p241 = por %p239, %p240
      %s243 = sadd.s32 %s242, 1
      %p246 = scmp.eq.s32.totalorder %s35, 7
      %p247 = scmp.ne.s32.totalorder %s242, %s244
      %p248 = scmp.eq.s32.totalorder %s35, 0
      %p249 = por %p247, %p248
      %p250 = scmp.ne.s32.totalorder %s242, %s244
      %p251 = scmp.eq.s32.totalorder %s40, 7
      %p252 = por %p250, %p251
      %p253 = scmp.ne.s32.totalorder %s244, %s245
      %p254 = scmp.eq.s32.totalorder %s40, 0
      %p255 = por %p253, %p254
      %p256 = scmp.ne.s32.totalorder %s244, %s245
      %p257 = scmp.eq.s32.totalorder %s41, 7
      %p258 = por %p256, %p257
      %p260 = scmp.ne.s32.totalorder %s245, %s259
      %p261 = scmp.eq.s32.totalorder %s41, 0
      %p262 = por %p260, %p261
      %s264 = sadd.s32 %s263, 1
      %p267 = scmp.eq.s32.totalorder %s35, 7
      %p268 = scmp.ne.s32.totalorder %s263, %s265
      %p269 = scmp.eq.s32.totalorder %s35, 0
      %p270 = por %p268, %p269
      %p271 = scmp.ne.s32.totalorder %s263, %s265
      %p272 = scmp.eq.s32.totalorder %s40, 7
      %p273 = por %p271, %p272
      %p274 = scmp.ne.s32.totalorder %s265, %s266
      %p275 = scmp.eq.s32.totalorder %s40, 0
      %p276 = por %p274, %p275
      %p277 = scmp.ne.s32.totalorder %s265, %s266
      %p278 = scmp.eq.s32.totalorder %s41, 7
      %p279 = por %p277, %p278
      %p281 = scmp.ne.s32.totalorder %s266, %s280
      %p282 = scmp.eq.s32.totalorder %s41, 0
      %p283 = por %p281, %p282
      %s285 = sadd.s32 %s284, 1
      %p288 = scmp.eq.s32.totalorder %s35, 7
      %p289 = scmp.ne.s32.totalorder %s284, %s286
      %p290 = scmp.eq.s32.totalorder %s35, 0
      %p291 = por %p289, %p290
      %p292 = scmp.ne.s32.totalorder %s284, %s286
      %p293 = scmp.eq.s32.totalorder %s40, 7
      %p294 = por %p292, %p293
      %p295 = scmp.ne.s32.totalorder %s286, %s287
      %p296 = scmp.eq.s32.totalorder %s40, 0
      %p297 = por %p295, %p296
      %p298 = scmp.ne.s32.totalorder %s286, %s287
      %p299 = scmp.eq.s32.totalorder %s41, 7
      %p300 = por %p298, %p299
      %p302 = scmp.ne.s32.totalorder %s287, %s301
      %p303 = scmp.eq.s32.totalorder %s41, 0
      %p304 = por %p302, %p303
      %s306 = sadd.s32 %s305, 1
      %p309 = scmp.eq.s32.totalorder %s35, 7
      %p310 = scmp.ne.s32.totalorder %s305, %s307
      %p311 = scmp.eq.s32.totalorder %s35, 0
      %p312 = por %p310, %p311
      %p313 = scmp.ne.s32.totalorder %s305, %s307
      %p314 = scmp.eq.s32.totalorder %s40, 7
      %p315 = por %p313, %p314
      %p316 = scmp.ne.s32.totalorder %s307, %s308
      %p317 = scmp.eq.s32.totalorder %s40, 0
      %p318 = por %p316, %p317
      %p319 = scmp.ne.s32.totalorder %s307, %s308
      %p320 = scmp.eq.s32.totalorder %s41, 7
      %p321 = por %p319, %p320
      %p323 = scmp.ne.s32.totalorder %s308, %s322
      %p324 = scmp.eq.s32.totalorder %s41, 0
      %p325 = por %p323, %p324
      %s327 = sadd.s32 %s326, 1
      %p330 = scmp.eq.s32.totalorder %s35, 7
      %p331 = scmp.ne.s32.totalorder %s326, %s328
      %p332 = scmp.eq.s32.totalorder %s35, 0
      %p333 = por %p331, %p332
      %p334 = scmp.ne.s32.totalorder %s326, %s328
      %p335 = scmp.eq.s32.totalorder %s40, 7
      %p336 = por %p334, %p335
      %p337 = scmp.ne.s32.totalorder %s328, %s329
      %p338 = scmp.eq.s32.totalorder %s40, 0
      %p339 = por %p337, %p338
      %p340 = scmp.ne.s32.totalorder %s328, %s329
      %p341 = scmp.eq.s32.totalorder %s41, 7
      %p342 = por %p340, %p341
      %p344 = scmp.ne.s32.totalorder %s329, %s343
      %p345 = scmp.eq.s32.totalorder %s41, 0
      %p346 = por %p344, %p345
      %s348 = sadd.s32 %s347, 1
      %p351 = scmp.eq.s32.totalorder %s35, 7
      %p352 = scmp.ne.s32.totalorder %s347, %s349
      %p353 = scmp.eq.s32.totalorder %s35, 0
      %p354 = por %p352, %p353
      %p355 = scmp.ne.s32.totalorder %s347, %s349
      %p356 = scmp.eq.s32.totalorder %s40, 7
      %p357 = por %p355, %p356
      %p358 = scmp.ne.s32.totalorder %s349, %s350
      %p359 = scmp.eq.s32.totalorder %s40, 0
      %p360 = por %p358, %p359
      %p361 = scmp.ne.s32.totalorder %s349, %s350
      %p362 = scmp.eq.s32.totalorder %s41, 7
      %p363 = por %p361, %p362
      %p365 = scmp.ne.s32.totalorder %s350, %s364
      %p366 = scmp.eq.s32.totalorder %s41, 0
      %p367 = por %p365, %p366
      %s368 = ssub.s32 %s35, %s42
      %p369 = scmp.eq.s32.totalorder %s368, 0
      %s371 = sadd.s32 %s370, 1
      %s372 = scalar_select %p369, %s370, %s371
      %p375 = pneg %p369
      %p376 = scmp.eq.s32.totalorder %s35, 7
      %p377 = por %p375, %p376
      %p378 = scmp.ne.s32.totalorder %s370, %s373
      %p379 = scmp.eq.s32.totalorder %s35, 0
      %p380 = por %p378, %p379
      %p381 = scmp.ne.s32.totalorder %s370, %s373
      %p382 = scmp.eq.s32.totalorder %s40, 7
      %p383 = por %p381, %p382
      %p384 = scmp.ne.s32.totalorder %s373, %s374
      %p385 = scmp.eq.s32.totalorder %s40, 0
      %p386 = por %p384, %p385
      %p387 = scmp.ne.s32.totalorder %s373, %s374
      %p388 = scmp.eq.s32.totalorder %s41, 7
      %p389 = por %p387, %p388
      %p391 = scmp.ne.s32.totalorder %s374, %s390
      %p392 = scmp.eq.s32.totalorder %s41, 0
      %p393 = por %p391, %p392
      %p394 = scmp.le.s32.totalorder 1, %s35
      %p395 = scmp.lt.s32.totalorder %s35, 9
      %p396 = pnand %p394, %p395
      %p397 = pneg %p396
      // Predicated region
      $region9: #{graphnet_forward.1} parent=5 // pred_check
        _
      $region10: #{graphnet_forward.1} parent=5 // pred_check_branch
        %399 = sbr.rel (%p396) target = $region12
      $region11: #{graphnet_forward.1} parent=5 // pred_region
        %s400 = ssub.s32 %s35, 1
        // Predicated region
        $region13: #{graphnet_forward.1} parent=11 // pred_check
          %p401 = pneg %p108
        $region14: #{graphnet_forward.1} parent=11 // pred_check_branch
          %403 = sbr.rel (%p401) target = $region16
        $region15: #{graphnet_forward.1} parent=11 // pred_region
          %405 = vsyncadd [#allocation6], 0
          %s406 = sshll.u32 %s2, 4
          %s407 = int_to_ptr.hbm [resolvable:$true] %s406
          %s408 = sshll.u32 [#allocation7], 4
          %s409 = int_to_ptr.vmem [resolvable:$true] %s408
          %414 = dma.hbm_to_vmem [thread:$0]  %s407, 6144, %s409, [#allocation6], 128, 128, 8
        $region16: #{graphnet_forward.1} parent=11 // pred_fallthru
          _
        // Predicated region
        $region17: #{graphnet_forward.1} parent=11 // pred_check
          %p415 = pneg %p129
        $region18: #{graphnet_forward.1} parent=11 // pred_check_branch
          %417 = sbr.rel (%p415) target = $region20
        $region19: #{graphnet_forward.1} parent=11 // pred_region
          %419 = vsyncadd [#allocation9], 0
          %s421 = sshll.u32 %s3, 4
          %s422 = int_to_ptr.hbm [resolvable:$true] %s421
          %s423 = sshll.u32 [#allocation8], 4
          %s424 = int_to_ptr.vmem [resolvable:$true] %s423
          %426 = dma.hbm_to_vmem [thread:$0]  %s422, 16, %s424, [#allocation9]
        $region20: #{graphnet_forward.1} parent=11 // pred_fallthru
          _
        // Predicated region
        $region21: #{graphnet_forward.1} parent=11 // pred_check
          %p427 = pneg %p150
        $region22: #{graphnet_forward.1} parent=11 // pred_check_branch
          %429 = sbr.rel (%p427) target = $region24
        $region23: #{graphnet_forward.1} parent=11 // pred_region
          %431 = vsyncadd [#allocation9], 0
          %s432 = sshll.u32 %s4, 4
          %s433 = int_to_ptr.hbm [resolvable:$true] %s432
          %s434 = sshll.u32 [#allocation10], 4
          %s435 = int_to_ptr.vmem [resolvable:$true] %s434
          %440 = dma.hbm_to_vmem [thread:$0]  %s433, 4096, %s435, [#allocation9], 128, 128, 8
        $region24: #{graphnet_forward.1} parent=11 // pred_fallthru
          _
        // Predicated region
        $region25: #{graphnet_forward.1} parent=11 // pred_check
          %p441 = pneg %p171
        $region26: #{graphnet_forward.1} parent=11 // pred_check_branch
          %443 = sbr.rel (%p441) target = $region28
        $region27: #{graphnet_forward.1} parent=11 // pred_region
          %445 = vsyncadd [#allocation12], 0
          %s446 = sshll.u32 %s5, 4
          %s447 = int_to_ptr.hbm [resolvable:$true] %s446
          %s448 = sshll.u32 [#allocation11], 4
          %s449 = int_to_ptr.vmem [resolvable:$true] %s448
          %454 = dma.hbm_to_vmem [thread:$0]  %s447, 4096, %s449, [#allocation12], 128, 128, 8
        $region28: #{graphnet_forward.1} parent=11 // pred_fallthru
          _
        // Predicated region
        $region29: #{graphnet_forward.1} parent=11 // pred_check
          %p455 = pneg %p192
        $region30: #{graphnet_forward.1} parent=11 // pred_check_branch
          %457 = sbr.rel (%p455) target = $region32
        $region31: #{graphnet_forward.1} parent=11 // pred_region
          _
        $region32: #{graphnet_forward.1} parent=11 // pred_fallthru
          _
        // Predicated region
        $region33: #{graphnet_forward.1} parent=11 // pred_check
          %p458 = pneg %p213
        $region34: #{graphnet_forward.1} parent=11 // pred_check_branch
          %460 = sbr.rel (%p458) target = $region36
        $region35: #{graphnet_forward.1} parent=11 // pred_region
          _
        $region36: #{graphnet_forward.1} parent=11 // pred_fallthru
          _
        // Predicated region
        $region37: #{graphnet_forward.1} parent=11 // pred_check
          %p461 = pneg %p234
        $region38: #{graphnet_forward.1} parent=11 // pred_check_branch
          %463 = sbr.rel (%p461) target = $region40
        $region39: #{graphnet_forward.1} parent=11 // pred_region
          _
        $region40: #{graphnet_forward.1} parent=11 // pred_fallthru
          _
        // Predicated region
        $region41: #{graphnet_forward.1} parent=11 // pred_check
          %p464 = pneg %p255
        $region42: #{graphnet_forward.1} parent=11 // pred_check_branch
          %466 = sbr.rel (%p464) target = $region44
        $region43: #{graphnet_forward.1} parent=11 // pred_region
          %468 = vsyncadd [#allocation12], 0
          %s469 = sshll.u32 %s9, 4
          %s470 = int_to_ptr.hbm [resolvable:$true] %s469
          %s471 = sshll.u32 [#allocation13], 4
          %s472 = int_to_ptr.vmem [resolvable:$true] %s471
          %477 = dma.hbm_to_vmem [thread:$0]  %s470, 2048, %s472, [#allocation12], 128, 128, 8
        $region44: #{graphnet_forward.1} parent=11 // pred_fallthru
          _
        // Predicated region
        $region45: #{graphnet_forward.1} parent=11 // pred_check
          %p478 = pneg %p276
        $region46: #{graphnet_forward.1} parent=11 // pred_check_branch
          %480 = sbr.rel (%p478) target = $region48
        $region47: #{graphnet_forward.1} parent=11 // pred_region
          %482 = vsyncadd [#allocation15], 0
          %s484 = sshll.u32 %s10, 4
          %s485 = int_to_ptr.hbm [resolvable:$true] %s484
          %s486 = sshll.u32 [#allocation14], 4
          %s487 = int_to_ptr.vmem [resolvable:$true] %s486
          %489 = dma.hbm_to_vmem [thread:$0]  %s485, 16, %s487, [#allocation15]
        $region48: #{graphnet_forward.1} parent=11 // pred_fallthru
          _
        // Predicated region
        $region49: #{graphnet_forward.1} parent=11 // pred_check
          %p490 = pneg %p297
        $region50: #{graphnet_forward.1} parent=11 // pred_check_branch
          %492 = sbr.rel (%p490) target = $region52
        $region51: #{graphnet_forward.1} parent=11 // pred_region
          %494 = vsyncadd [#allocation15], 0
          %s495 = sshll.u32 %s11, 4
          %s496 = int_to_ptr.hbm [resolvable:$true] %s495
          %s497 = sshll.u32 [#allocation16], 4
          %s498 = int_to_ptr.vmem [resolvable:$true] %s497
          %503 = dma.hbm_to_vmem [thread:$0]  %s496, 2048, %s498, [#allocation15], 128, 128, 8
        $region52: #{graphnet_forward.1} parent=11 // pred_fallthru
          _
        // Predicated region
        $region53: #{graphnet_forward.1} parent=11 // pred_check
          %p504 = pneg %p318
        $region54: #{graphnet_forward.1} parent=11 // pred_check_branch
          %506 = sbr.rel (%p504) target = $region56
        $region55: #{graphnet_forward.1} parent=11 // pred_region
          %508 = vsyncadd [#allocation18], 0
          %s510 = sshll.u32 %s12, 4
          %s511 = int_to_ptr.hbm [resolvable:$true] %s510
          %s512 = sshll.u32 [#allocation17], 4
          %s513 = int_to_ptr.vmem [resolvable:$true] %s512
          %515 = dma.hbm_to_vmem [thread:$0]  %s511, 16, %s513, [#allocation18]
        $region56: #{graphnet_forward.1} parent=11 // pred_fallthru
          _
        // Predicated region
        $region57: #{graphnet_forward.1} parent=11 // pred_check
          %p516 = pneg %p339
        $region58: #{graphnet_forward.1} parent=11 // pred_check_branch
          %518 = sbr.rel (%p516) target = $region60
        $region59: #{graphnet_forward.1} parent=11 // pred_region
          %520 = vsyncadd [#allocation18], 0
          %s521 = sshll.u32 %s13, 4
          %s522 = int_to_ptr.hbm [resolvable:$true] %s521
          %s523 = sshll.u32 [#allocation19], 4
          %s524 = int_to_ptr.vmem [resolvable:$true] %s523
          %529 = dma.hbm_to_vmem [thread:$0]  %s522, 2048, %s524, [#allocation18], 128, 128, 8
        $region60: #{graphnet_forward.1} parent=11 // pred_fallthru
          _
        // Predicated region
        $region61: #{graphnet_forward.1} parent=11 // pred_check
          %p530 = pneg %p360
        $region62: #{graphnet_forward.1} parent=11 // pred_check_branch
          %532 = sbr.rel (%p530) target = $region64
        $region63: #{graphnet_forward.1} parent=11 // pred_region
          %534 = vsyncadd [#allocation21], 0
          %s536 = sshll.u32 %s14, 4
          %s537 = int_to_ptr.hbm [resolvable:$true] %s536
          %s538 = sshll.u32 [#allocation20], 4
          %s539 = int_to_ptr.vmem [resolvable:$true] %s538
          %541 = dma.hbm_to_vmem [thread:$0]  %s537, 16, %s539, [#allocation21]
        $region64: #{graphnet_forward.1} parent=11 // pred_fallthru
          _
      $region12: #{graphnet_forward.1} parent=5 // pred_fallthru
        _
      %p542 = scmp.lt.s32.totalorder %s35, 8
      // Predicated region
      $region65: #{graphnet_forward.1} parent=5 // pred_check
        %p543 = pneg %p542
      $region66: #{graphnet_forward.1} parent=5 // pred_check_branch
        %545 = sbr.rel (%p543) target = $region68
      $region67: #{graphnet_forward.1} parent=5 // pred_region
        // Predicated region
        $region69: #{graphnet_forward.1} parent=67 // pred_check
          %p546 = pneg %p55
        $region70: #{graphnet_forward.1} parent=67 // pred_check_branch
          %548 = sbr.rel (%p546) target = $region72
        $region71: #{graphnet_forward.1} parent=67 // pred_region
          %s549 = sand.u32 %s45, 1
          %s550 = scalar_lea.sflag [#allocation3], %s549
          %s551 = sand.u32 %s45, 1
          %s552 = smul.addr %s551, 48
          %s553 = scalar_lea.vmem [#allocation2], %s552
          %555 = vsyncadd %s550, 0
          %s556 = smul.addr %s35, 6
          %s557 = smul.addr %s556, 8
          %s558 = scalar_lea.hbm %s0, %s557
          %s559 = sshll.u32 %s558, 4
          %s560 = int_to_ptr.hbm [resolvable:$true] %s559
          %s561 = sshll.u32 %s553, 4
          %s562 = int_to_ptr.vmem [resolvable:$true] %s561
          %567 = dma.hbm_to_vmem [thread:$0]  %s560, 768, %s562, %s550, 384, 384, 24
        $region72: #{graphnet_forward.1} parent=67 // pred_fallthru
          _
        // Predicated region
        $region73: #{graphnet_forward.1} parent=67 // pred_check
          %p568 = pneg %p81
        $region74: #{graphnet_forward.1} parent=67 // pred_check_branch
          %570 = sbr.rel (%p568) target = $region76
        $region75: #{graphnet_forward.1} parent=67 // pred_region
          %s571 = sand.u32 %s35, 1
          %s572 = scalar_lea.sflag [#allocation6], %s571
          %s573 = sand.u32 %s71, 1
          %s574 = smul.addr %s573, 16
          %s575 = scalar_lea.vmem [#allocation5], %s574
          %577 = vsyncadd %s572, 0
          %s578 = smul.addr %s35, 2
          %s579 = smul.addr %s578, 8
          %s580 = scalar_lea.hbm %s1, %s579
          %s581 = sshll.u32 %s580, 4
          %s582 = int_to_ptr.hbm [resolvable:$true] %s581
          %s583 = sshll.u32 %s575, 4
          %s584 = int_to_ptr.vmem [resolvable:$true] %s583
          %589 = dma.hbm_to_vmem [thread:$0]  %s582, 256, %s584, %s572, 128, 128, 8
        $region76: #{graphnet_forward.1} parent=67 // pred_fallthru
          _
      $region68: #{graphnet_forward.1} parent=5 // pred_fallthru
        _
      %p590 = scmp.le.s32.totalorder 1, %s35
      %p591 = scmp.lt.s32.totalorder %s35, 9
      %p592 = pnand %p590, %p591
      %p593 = pneg %p592
      // Predicated region
      $region77: #{graphnet_forward.1} parent=5 // pred_check
        _
      $region78: #{graphnet_forward.1} parent=5 // pred_check_branch
        %595 = sbr.rel (%p592) target = $region80
      $region79: #{graphnet_forward.1} parent=5 // pred_region
        %s596 = ssub.s32 %s35, 1
        %s597 = sand.u32 %s48, 1
        %s598 = scalar_lea.sflag [#allocation3], %s597
        %s599 = sand.u32 %s48, 1
        %s600 = smul.addr %s599, 48
        %s601 = scalar_lea.vmem [#allocation2], %s600
        // Predicated region
        $region81: #{graphnet_forward.1} parent=79 // pred_check
          %p602 = pneg %p61
        $region82: #{graphnet_forward.1} parent=79 // pred_check_branch
          %604 = sbr.rel (%p602) target = $region84
        $region83: #{graphnet_forward.1} parent=79 // pred_region
          %606 = dma.done %s598, 768
        $region84: #{graphnet_forward.1} parent=79 // pred_fallthru
          _
        %s607 = sand.u32 %s40, 1
        %s608 = scalar_lea.sflag [#allocation6], %s607
        %s609 = sand.u32 %s74, 1
        %s610 = smul.addr %s609, 16
        %s611 = scalar_lea.vmem [#allocation5], %s610
        // Predicated region
        $region85: #{graphnet_forward.1} parent=79 // pred_check
          %p612 = pneg %p87
        $region86: #{graphnet_forward.1} parent=79 // pred_check_branch
          %614 = sbr.rel (%p612) target = $region88
        $region87: #{graphnet_forward.1} parent=79 // pred_region
          %616 = dma.done %s608, 256
        $region88: #{graphnet_forward.1} parent=79 // pred_fallthru
          _
        // Predicated region
        $region89: #{graphnet_forward.1} parent=79 // pred_check
          %p617 = pneg %p108
        $region90: #{graphnet_forward.1} parent=79 // pred_check_branch
          %619 = sbr.rel (%p617) target = $region92
        $region91: #{graphnet_forward.1} parent=79 // pred_region
          %621 = dma.done [#allocation6], 6144
        $region92: #{graphnet_forward.1} parent=79 // pred_fallthru
          _
        // Predicated region
        $region93: #{graphnet_forward.1} parent=79 // pred_check
          %p622 = pneg %p129
        $region94: #{graphnet_forward.1} parent=79 // pred_check_branch
          %624 = sbr.rel (%p622) target = $region96
        $region95: #{graphnet_forward.1} parent=79 // pred_region
          %626 = dma.done [#allocation9], 16
        $region96: #{graphnet_forward.1} parent=79 // pred_fallthru
          _
        // Predicated region
        $region97: #{graphnet_forward.1} parent=79 // pred_check
          %p627 = pneg %p150
        $region98: #{graphnet_forward.1} parent=79 // pred_check_branch
          %629 = sbr.rel (%p627) target = $region100
        $region99: #{graphnet_forward.1} parent=79 // pred_region
          %631 = dma.done [#allocation9], 4096
        $region100: #{graphnet_forward.1} parent=79 // pred_fallthru
          _
        // Predicated region
        $region101: #{graphnet_forward.1} parent=79 // pred_check
          %p632 = pneg %p171
        $region102: #{graphnet_forward.1} parent=79 // pred_check_branch
          %634 = sbr.rel (%p632) target = $region104
        $region103: #{graphnet_forward.1} parent=79 // pred_region
          %636 = dma.done [#allocation12], 4096
        $region104: #{graphnet_forward.1} parent=79 // pred_fallthru
          _
        // Predicated region
        $region105: #{graphnet_forward.1} parent=79 // pred_check
          %p637 = pneg %p255
        $region106: #{graphnet_forward.1} parent=79 // pred_check_branch
          %639 = sbr.rel (%p637) target = $region108
        $region107: #{graphnet_forward.1} parent=79 // pred_region
          %641 = dma.done [#allocation12], 2048
        $region108: #{graphnet_forward.1} parent=79 // pred_fallthru
          _
        // Predicated region
        $region109: #{graphnet_forward.1} parent=79 // pred_check
          %p642 = pneg %p276
        $region110: #{graphnet_forward.1} parent=79 // pred_check_branch
          %644 = sbr.rel (%p642) target = $region112
        $region111: #{graphnet_forward.1} parent=79 // pred_region
          %646 = dma.done [#allocation15], 16
        $region112: #{graphnet_forward.1} parent=79 // pred_fallthru
          _
        // Predicated region
        $region113: #{graphnet_forward.1} parent=79 // pred_check
          %p647 = pneg %p297
        $region114: #{graphnet_forward.1} parent=79 // pred_check_branch
          %649 = sbr.rel (%p647) target = $region116
        $region115: #{graphnet_forward.1} parent=79 // pred_region
          %651 = dma.done [#allocation15], 2048
        $region116: #{graphnet_forward.1} parent=79 // pred_fallthru
          _
        // Predicated region
        $region117: #{graphnet_forward.1} parent=79 // pred_check
          %p652 = pneg %p318
        $region118: #{graphnet_forward.1} parent=79 // pred_check_branch
          %654 = sbr.rel (%p652) target = $region120
        $region119: #{graphnet_forward.1} parent=79 // pred_region
          %656 = dma.done [#allocation18], 16
        $region120: #{graphnet_forward.1} parent=79 // pred_fallthru
          _
        // Predicated region
        $region121: #{graphnet_forward.1} parent=79 // pred_check
          %p657 = pneg %p339
        $region122: #{graphnet_forward.1} parent=79 // pred_check_branch
          %659 = sbr.rel (%p657) target = $region124
        $region123: #{graphnet_forward.1} parent=79 // pred_region
          %661 = dma.done [#allocation18], 2048
        $region124: #{graphnet_forward.1} parent=79 // pred_fallthru
          _
        // Predicated region
        $region125: #{graphnet_forward.1} parent=79 // pred_check
          %p662 = pneg %p360
        $region126: #{graphnet_forward.1} parent=79 // pred_check_branch
          %664 = sbr.rel (%p662) target = $region128
        $region127: #{graphnet_forward.1} parent=79 // pred_region
          %666 = dma.done [#allocation21], 16
        $region128: #{graphnet_forward.1} parent=79 // pred_fallthru
          _
        %s667 = sand.u32 %s48, 1
        %s668 = scalar_lea.sflag [#allocation3], %s667
        %s669 = sand.u32 %s48, 1
        %s670 = smul.addr %s669, 48
        %s671 = scalar_lea.vmem [#allocation2], %s670
        %p672 = pneg %p61
        %p673 = pneg %p58
        %s674 = sand.u32 %s40, 1
        %s675 = scalar_lea.sflag [#allocation6], %s674
        %s676 = sand.u32 %s74, 1
        %s677 = smul.addr %s676, 16
        %s678 = scalar_lea.vmem [#allocation5], %s677
        %p679 = pneg %p87
        %p680 = pneg %p84
        %p681 = pneg %p108
        %p682 = pneg %p105
        %p683 = pneg %p129
        %p684 = pneg %p126
        %p685 = pneg %p150
        %p686 = pneg %p147
        %p687 = pneg %p171
        %p688 = pneg %p168
        %p689 = pneg %p192
        %p690 = pneg %p189
        %p691 = pneg %p213
        %p692 = pneg %p210
        %p693 = pneg %p234
        %p694 = pneg %p231
        %p695 = pneg %p255
        %p696 = pneg %p252
        %p697 = pneg %p276
        %p698 = pneg %p273
        %p699 = pneg %p297
        %p700 = pneg %p294
        %p701 = pneg %p318
        %p702 = pneg %p315
        %p703 = pneg %p339
        %p704 = pneg %p336
        %p705 = pneg %p360
        %p706 = pneg %p357
        %p707 = pneg %p386
        %p708 = pneg %p383
        %s709 = sand.u32 %s373, 1
        %s710 = scalar_lea.sflag [#allocation4], %s709
        %s711 = sand.u32 %s373, 1
        %s712 = scalar_lea.vmem [#allocation22], %s711
        %v713 = vld [vmem:[%s601] sm:$0xff]
        %v714 = vld [vmem:[%s601 + $0x8] sm:$0xff]
        %v715 = vld [vmem:[%s601 + $0x10] sm:$0xff]
        %v716 = vld [vmem:[%s601 + $0x18] sm:$0xff]
        %v717 = vld [vmem:[%s601 + $0x20] sm:$0xff]
        %v718 = vld [vmem:[%s601 + $0x28] sm:$0xff]
        %v719 = vld [vmem:[#allocation7] sm:$0xff]
        %v720 = vld [vmem:[#allocation7 + $0x8] sm:$0xff]
        %v721 = vld [vmem:[#allocation7 + $0x10] sm:$0xff]
        %v722 = vld [vmem:[#allocation7 + $0x18] sm:$0xff]
        %v723 = vld [vmem:[#allocation7 + $0x20] sm:$0xff]
        %v724 = vld [vmem:[#allocation7 + $0x28] sm:$0xff]
        %v725 = vld [vmem:[#allocation7 + $0x30] sm:$0xff]
        %v726 = vld [vmem:[#allocation7 + $0x38] sm:$0xff]
        %v727 = vld [vmem:[#allocation7 + $0x40] sm:$0xff]
        %v728 = vld [vmem:[#allocation7 + $0x48] sm:$0xff]
        %v729 = vld [vmem:[#allocation7 + $0x50] sm:$0xff]
        %v730 = vld [vmem:[#allocation7 + $0x58] sm:$0xff]
        %v731 = vld [vmem:[#allocation7 + $0x60] sm:$0xff]
        %v732 = vld [vmem:[#allocation7 + $0x68] sm:$0xff]
        %v733 = vld [vmem:[#allocation7 + $0x70] sm:$0xff]
        %v734 = vld [vmem:[#allocation7 + $0x78] sm:$0xff]
        %v735 = vld [vmem:[#allocation7 + $0x80] sm:$0xff]
        %v736 = vld [vmem:[#allocation7 + $0x88] sm:$0xff]
        %v737 = vld [vmem:[#allocation7 + $0x90] sm:$0xff]
        %v738 = vld [vmem:[#allocation7 + $0x98] sm:$0xff]
        %v739 = vld [vmem:[#allocation7 + $0xa0] sm:$0xff]
        %v740 = vld [vmem:[#allocation7 + $0xa8] sm:$0xff]
        %v741 = vld [vmem:[#allocation7 + $0xb0] sm:$0xff]
        %v742 = vld [vmem:[#allocation7 + $0xb8] sm:$0xff]
        %v743 = vld [vmem:[#allocation7 + $0xc0] sm:$0xff]
        %v744 = vld [vmem:[#allocation7 + $0xc8] sm:$0xff]
        %v745 = vld [vmem:[#allocation7 + $0xd0] sm:$0xff]
        %v746 = vld [vmem:[#allocation7 + $0xd8] sm:$0xff]
        %v747 = vld [vmem:[#allocation7 + $0xe0] sm:$0xff]
        %v748 = vld [vmem:[#allocation7 + $0xe8] sm:$0xff]
        %v749 = vld [vmem:[#allocation7 + $0xf0] sm:$0xff]
        %v750 = vld [vmem:[#allocation7 + $0xf8] sm:$0xff]
        %v751 = vld [vmem:[#allocation7 + $0x100] sm:$0xff]
        %v752 = vld [vmem:[#allocation7 + $0x108] sm:$0xff]
        %v753 = vld [vmem:[#allocation7 + $0x110] sm:$0xff]
        %v754 = vld [vmem:[#allocation7 + $0x118] sm:$0xff]
        %v755 = vld [vmem:[#allocation7 + $0x120] sm:$0xff]
        %v756 = vld [vmem:[#allocation7 + $0x128] sm:$0xff]
        %v757 = vld [vmem:[#allocation7 + $0x130] sm:$0xff]
        %v758 = vld [vmem:[#allocation7 + $0x138] sm:$0xff]
        %v759 = vld [vmem:[#allocation7 + $0x140] sm:$0xff]
        %v760 = vld [vmem:[#allocation7 + $0x148] sm:$0xff]
        %v761 = vld [vmem:[#allocation7 + $0x150] sm:$0xff]
        %v762 = vld [vmem:[#allocation7 + $0x158] sm:$0xff]
        %v763 = vld [vmem:[#allocation7 + $0x160] sm:$0xff]
        %v764 = vld [vmem:[#allocation7 + $0x168] sm:$0xff]
        %v765 = vld [vmem:[#allocation7 + $0x170] sm:$0xff]
        %v766 = vld [vmem:[#allocation7 + $0x178] sm:$0xff]
        %v767 = vld [vmem:[#allocation8] sm:$0x1]
        %v769 = vperm.slane %v767, 0
        %771 = vmatpush.msra.mxu0 %v734
        %772 = vmatpush.msra.mxu0 %v733
        %773 = vmatpush.msra.mxu0 %v732
        %774 = vmatpush.msra.mxu0 %v731
        %775 = vmatpush.msra.mxu0 %v730
        %776 = vmatpush.msra.mxu0 %v729
        %777 = vmatpush.msra.mxu0 %v728
        %778 = vmatpush.msra.mxu0 %v727
        %779 = vmatpush.msra.mxu0 %v726
        %780 = vmatpush.msra.mxu0 %v725
        %781 = vmatpush.msra.mxu0 %v724
        %782 = vmatpush.msra.mxu0 %v723
        %783 = vmatpush.msra.mxu0 %v722
        %784 = vmatpush.msra.mxu0 %v721
        %785 = vmatpush.msra.mxu0 %v720
        %786 = vmatpush.msra.mxu0 %v719
        %787 = vmatmul.f32.gmra.mxu0 %v713
        %v788 = vpop.f32.mrf.mxu0
        %v789 = vadd.f32 %v769, %v788
        %790 = vmatmul.f32.gmra.mxu0 %v716
        %v791 = vpop.f32.mrf.mxu0
        %v792 = vadd.f32 %v769, %v791
        %793 = vdwg.mxu0
        %794 = vmatpush.msra.mxu0 %v750
        %795 = vmatpush.msra.mxu0 %v749
        %796 = vmatpush.msra.mxu0 %v748
        %797 = vmatpush.msra.mxu0 %v747
        %798 = vmatpush.msra.mxu0 %v746
        %799 = vmatpush.msra.mxu0 %v745
        %800 = vmatpush.msra.mxu0 %v744
        %801 = vmatpush.msra.mxu0 %v743
        %802 = vmatpush.msra.mxu0 %v742
        %803 = vmatpush.msra.mxu0 %v741
        %804 = vmatpush.msra.mxu0 %v740
        %805 = vmatpush.msra.mxu0 %v739
        %806 = vmatpush.msra.mxu0 %v738
        %807 = vmatpush.msra.mxu0 %v737
        %808 = vmatpush.msra.mxu0 %v736
        %809 = vmatpush.msra.mxu0 %v735
        %810 = vmatmul.f32.gmra.mxu0 %v714
        %v811 = vpop.f32.mrf.mxu0
        %v812 = vadd.f32 %v789, %v811
        %813 = vmatmul.f32.gmra.mxu0 %v717
        %v814 = vpop.f32.mrf.mxu0
        %v815 = vadd.f32 %v792, %v814
        %816 = vdwg.mxu0
        %817 = vmatpush.msra.mxu0 %v766
        %818 = vmatpush.msra.mxu0 %v765
        %819 = vmatpush.msra.mxu0 %v764
        %820 = vmatpush.msra.mxu0 %v763
        %821 = vmatpush.msra.mxu0 %v762
        %822 = vmatpush.msra.mxu0 %v761
        %823 = vmatpush.msra.mxu0 %v760
        %824 = vmatpush.msra.mxu0 %v759
        %825 = vmatpush.msra.mxu0 %v758
        %826 = vmatpush.msra.mxu0 %v757
        %827 = vmatpush.msra.mxu0 %v756
        %828 = vmatpush.msra.mxu0 %v755
        %829 = vmatpush.msra.mxu0 %v754
        %830 = vmatpush.msra.mxu0 %v753
        %831 = vmatpush.msra.mxu0 %v752
        %832 = vmatpush.msra.mxu0 %v751
        %833 = vmatmul.f32.gmra.mxu0 %v715
        %v834 = vpop.f32.mrf.mxu0
        %v835 = vadd.f32 %v812, %v834
        %836 = vmatmul.f32.gmra.mxu0 %v718
        %v837 = vpop.f32.mrf.mxu0
        %v838 = vadd.f32 %v815, %v837
        %839 = vdwg.mxu0
        %v840 = vld [vmem:[%s611] sm:$0xff]
        %v841 = vld [vmem:[%s611 + $0x8] sm:$0xff]
        %vm842 = vcmask 130048
        %v844 = vsel %vm842, %v840, 0
        %v847 = vsel %vm842, %v841, 0
        %849 = vmatpush.msra.mxu0 0.0
        %850 = vmatpush.msra.mxu0 0.0
        %851 = vmatpush.msra.mxu0 0.0
        %852 = vmatpush.msra.mxu0 0.0
        %853 = vmatpush.msra.mxu0 0.0
        %854 = vmatpush.msra.mxu0 0.0
        %855 = vmatpush.msra.mxu0 0.0
        %856 = vmatpush.msra.mxu0 0.0
        %857 = vmatpush.msra.mxu0 0.0
        %858 = vmatpush.msra.mxu0 0.0
        %859 = vmatpush.msra.mxu0 0.0
        %860 = vmatpush.msra.mxu0 0.0
        %861 = vmatpush.msra.mxu0 0.0
        %862 = vmatpush.msra.mxu0 0.0
        %863 = vmatpush.msra.mxu0 %v838
        %864 = vmatpush.msra.mxu0 %v835
        %865 = vmatmul.f32.gmra.mxu0 %v844
        %v866 = vpop.f32.mrf.mxu0
        %v867 = vadd.f32 0.0, %v866
        %868 = vmatmul.f32.gmra.mxu0 %v847
        %v869 = vpop.f32.mrf.mxu0
        %v870 = vadd.f32 0.0, %v869
        %871 = vdwg.mxu0
        %v872 = vld [vmem:[#allocation10] sm:$0xff]
        %v873 = vld [vmem:[#allocation10 + $0x8] sm:$0xff]
        %v874 = vld [vmem:[#allocation10 + $0x10] sm:$0xff]
        %v875 = vld [vmem:[#allocation10 + $0x18] sm:$0xff]
        %v876 = vld [vmem:[#allocation10 + $0x20] sm:$0xff]
        %v877 = vld [vmem:[#allocation10 + $0x28] sm:$0xff]
        %v878 = vld [vmem:[#allocation10 + $0x30] sm:$0xff]
        %v879 = vld [vmem:[#allocation10 + $0x38] sm:$0xff]
        %v880 = vld [vmem:[#allocation10 + $0x40] sm:$0xff]
        %v881 = vld [vmem:[#allocation10 + $0x48] sm:$0xff]
        %v882 = vld [vmem:[#allocation10 + $0x50] sm:$0xff]
        %v883 = vld [vmem:[#allocation10 + $0x58] sm:$0xff]
        %v884 = vld [vmem:[#allocation10 + $0x60] sm:$0xff]
        %v885 = vld [vmem:[#allocation10 + $0x68] sm:$0xff]
        %v886 = vld [vmem:[#allocation10 + $0x70] sm:$0xff]
        %v887 = vld [vmem:[#allocation10 + $0x78] sm:$0xff]
        %v888 = vld [vmem:[#allocation11] sm:$0xff]
        %v889 = vld [vmem:[#allocation11 + $0x8] sm:$0xff]
        %v890 = vld [vmem:[#allocation11 + $0x10] sm:$0xff]
        %v891 = vld [vmem:[#allocation11 + $0x18] sm:$0xff]
        %v892 = vld [vmem:[#allocation11 + $0x20] sm:$0xff]
        %v893 = vld [vmem:[#allocation11 + $0x28] sm:$0xff]
        %v894 = vld [vmem:[#allocation11 + $0x30] sm:$0xff]
        %v895 = vld [vmem:[#allocation11 + $0x38] sm:$0xff]
        %v896 = vld [vmem:[#allocation11 + $0x40] sm:$0xff]
        %v897 = vld [vmem:[#allocation11 + $0x48] sm:$0xff]
        %v898 = vld [vmem:[#allocation11 + $0x50] sm:$0xff]
        %v899 = vld [vmem:[#allocation11 + $0x58] sm:$0xff]
        %v900 = vld [vmem:[#allocation11 + $0x60] sm:$0xff]
        %v901 = vld [vmem:[#allocation11 + $0x68] sm:$0xff]
        %v902 = vld [vmem:[#allocation11 + $0x70] sm:$0xff]
        %v903 = vld [vmem:[#allocation11 + $0x78] sm:$0xff]
        %904 = vmatpush.msra.mxu0 %v903
        %905 = vmatpush.msra.mxu0 %v902
        %906 = vmatpush.msra.mxu0 %v901
        %907 = vmatpush.msra.mxu0 %v900
        %908 = vmatpush.msra.mxu0 %v899
        %909 = vmatpush.msra.mxu0 %v898
        %910 = vmatpush.msra.mxu0 %v897
        %911 = vmatpush.msra.mxu0 %v896
        %912 = vmatpush.msra.mxu0 %v895
        %913 = vmatpush.msra.mxu0 %v894
        %914 = vmatpush.msra.mxu0 %v893
        %915 = vmatpush.msra.mxu0 %v892
        %916 = vmatpush.msra.mxu0 %v891
        %917 = vmatpush.msra.mxu0 %v890
        %918 = vmatpush.msra.mxu0 %v889
        %919 = vmatpush.msra.mxu0 %v888
        %920 = vmatmul.f32.gmra.mxu0 %v867
        %v921 = vpop.f32.mrf.mxu0
        %v922 = vadd.f32 0.0, %v921
        %923 = vmatmul.f32.gmra.mxu0 %v870
        %v924 = vpop.f32.mrf.mxu0
        %v925 = vadd.f32 0.0, %v924
        %926 = vdwg.mxu0
        %927 = vmatpush.msra.mxu0 %v887
        %928 = vmatpush.msra.mxu0 %v886
        %929 = vmatpush.msra.mxu0 %v885
        %930 = vmatpush.msra.mxu0 %v884
        %931 = vmatpush.msra.mxu0 %v883
        %932 = vmatpush.msra.mxu0 %v882
        %933 = vmatpush.msra.mxu0 %v881
        %934 = vmatpush.msra.mxu0 %v880
        %935 = vmatpush.msra.mxu0 %v879
        %936 = vmatpush.msra.mxu0 %v878
        %937 = vmatpush.msra.mxu0 %v877
        %938 = vmatpush.msra.mxu0 %v876
        %939 = vmatpush.msra.mxu0 %v875
        %940 = vmatpush.msra.mxu0 %v874
        %941 = vmatpush.msra.mxu0 %v873
        %942 = vmatpush.msra.mxu0 %v872
        %943 = vmatmul.f32.gmra.mxu0 %v835
        %v944 = vpop.f32.mrf.mxu0
        %v945 = vadd.f32 %v922, %v944
        %946 = vmatmul.f32.gmra.mxu0 %v838
        %v947 = vpop.f32.mrf.mxu0
        %v948 = vadd.f32 %v925, %v947
        %949 = vdwg.mxu0
        %v950 = vld [vmem:[%s6] sm:$0x1]
        %v952 = vperm.slane %v950, 0
        %v954 = vadd.f32 %v945, %v952
        %v955 = vadd.f32 %v948, %v952
        %v956 = vmul.f32 %v954, %v954
        %v957 = vmul.f32 %v955, %v955
        %958 = vadd.xlane.f32.xlu0 %v956
        %v959 = vpop.xlane.xlu0 %958
        %960 = vadd.xlane.f32.xlu0 %v957
        %v961 = vpop.xlane.xlu0 %960
        %v962 = vmax.f32 %v959, 1e-24
        %v963 = vmax.f32 %v961, 1e-24
        %v964 = vrsqrt.pop %v962
        %v965 = vmul.f32 %v964, %v962
        %v966 = vmul.f32 %v965, %v964
        %v967 = vmul.f32 0.5, %v966
        %v968 = vsub.f32 1.5, %v967
        %v969 = vmul.f32 %v964, %v968
        %vm970 = vweird.f32 %v962
        %vm971 = vweird.f32 %v964
        %vm972 = vmor %vm970, %vm971
        %v973 = vsel %vm972, %v964, %v969
        %v974 = vrsqrt.pop %v963
        %v975 = vmul.f32 %v974, %v963
        %v976 = vmul.f32 %v975, %v974
        %v977 = vmul.f32 0.5, %v976
        %v978 = vsub.f32 1.5, %v977
        %v979 = vmul.f32 %v974, %v978
        %vm980 = vweird.f32 %v963
        %vm981 = vweird.f32 %v974
        %vm982 = vmor %vm980, %vm981
        %v983 = vsel %vm982, %v974, %v979
        %v984 = vmul.f32 %v954, %v973
        %v985 = vmul.f32 %v955, %v983
        %v986 = vmax.f32 %v984, 0.0
        %v987 = vmax.f32 %v985, 0.0
        %v988 = vld [vmem:[%s7] sm:$0x1]
        %v990 = vperm.slane %v988, 0
        %v992 = vmul.f32 %v986, %v990
        %v993 = vmul.f32 %v987, %v990
        %v994 = vld [vmem:[%s8] sm:$0x1]
        %v996 = vperm.slane %v994, 0
        %v998 = vadd.f32 %v992, %v996
        %v999 = vadd.f32 %v993, %v996
        %v1000 = vadd.f32 %v835, %v998
        %v1001 = vadd.f32 %v838, %v999
        %1002 = vmatpush.msra.mxu0 0.0
        %1003 = vmatpush.msra.mxu0 0.0
        %1004 = vmatpush.msra.mxu0 0.0
        %1005 = vmatpush.msra.mxu0 0.0
        %1006 = vmatpush.msra.mxu0 0.0
        %1007 = vmatpush.msra.mxu0 0.0
        %1008 = vmatpush.msra.mxu0 0.0
        %1009 = vmatpush.msra.mxu0 0.0
        %1010 = vmatpush.msra.mxu0 0.0
        %1011 = vmatpush.msra.mxu0 0.0
        %1012 = vmatpush.msra.mxu0 0.0
        %1013 = vmatpush.msra.mxu0 0.0
        %1014 = vmatpush.msra.mxu0 0.0
        %1015 = vmatpush.msra.mxu0 0.0
        %1016 = vmatpush.msra.mxu0 %v1001
        %1017 = vmatpush.msra.mxu0 %v1000
        %1018 = vmatmul.f32.gmra.mxu0 %v844
        %v1019 = vpop.f32.mrf.mxu0
        %v1020 = vadd.f32 0.0, %v1019
        %1021 = vmatmul.f32.gmra.mxu0 %v847
        %v1022 = vpop.f32.mrf.mxu0
        %v1023 = vadd.f32 0.0, %v1022
        %1024 = vdwg.mxu0
        %s1025 = scalar_lea.vmem [#allocation10], 128
        %v1026 = vld [vmem:[%s1025] sm:$0xff]
        %v1027 = vld [vmem:[%s1025 + $0x8] sm:$0xff]
        %v1028 = vld [vmem:[%s1025 + $0x10] sm:$0xff]
        %v1029 = vld [vmem:[%s1025 + $0x18] sm:$0xff]
        %v1030 = vld [vmem:[%s1025 + $0x20] sm:$0xff]
        %v1031 = vld [vmem:[%s1025 + $0x28] sm:$0xff]
        %v1032 = vld [vmem:[%s1025 + $0x30] sm:$0xff]
        %v1033 = vld [vmem:[%s1025 + $0x38] sm:$0xff]
        %v1034 = vld [vmem:[%s1025 + $0x40] sm:$0xff]
        %v1035 = vld [vmem:[%s1025 + $0x48] sm:$0xff]
        %v1036 = vld [vmem:[%s1025 + $0x50] sm:$0xff]
        %v1037 = vld [vmem:[%s1025 + $0x58] sm:$0xff]
        %v1038 = vld [vmem:[%s1025 + $0x60] sm:$0xff]
        %v1039 = vld [vmem:[%s1025 + $0x68] sm:$0xff]
        %v1040 = vld [vmem:[%s1025 + $0x70] sm:$0xff]
        %v1041 = vld [vmem:[%s1025 + $0x78] sm:$0xff]
        %s1042 = scalar_lea.vmem [#allocation11], 128
        %v1043 = vld [vmem:[%s1042] sm:$0xff]
        %v1044 = vld [vmem:[%s1042 + $0x8] sm:$0xff]
        %v1045 = vld [vmem:[%s1042 + $0x10] sm:$0xff]
        %v1046 = vld [vmem:[%s1042 + $0x18] sm:$0xff]
        %v1047 = vld [vmem:[%s1042 + $0x20] sm:$0xff]
        %v1048 = vld [vmem:[%s1042 + $0x28] sm:$0xff]
        %v1049 = vld [vmem:[%s1042 + $0x30] sm:$0xff]
        %v1050 = vld [vmem:[%s1042 + $0x38] sm:$0xff]
        %v1051 = vld [vmem:[%s1042 + $0x40] sm:$0xff]
        %v1052 = vld [vmem:[%s1042 + $0x48] sm:$0xff]
        %v1053 = vld [vmem:[%s1042 + $0x50] sm:$0xff]
        %v1054 = vld [vmem:[%s1042 + $0x58] sm:$0xff]
        %v1055 = vld [vmem:[%s1042 + $0x60] sm:$0xff]
        %v1056 = vld [vmem:[%s1042 + $0x68] sm:$0xff]
        %v1057 = vld [vmem:[%s1042 + $0x70] sm:$0xff]
        %v1058 = vld [vmem:[%s1042 + $0x78] sm:$0xff]
        %1059 = vmatpush.msra.mxu0 %v1058
        %1060 = vmatpush.msra.mxu0 %v1057
        %1061 = vmatpush.msra.mxu0 %v1056
        %1062 = vmatpush.msra.mxu0 %v1055
        %1063 = vmatpush.msra.mxu0 %v1054
        %1064 = vmatpush.msra.mxu0 %v1053
        %1065 = vmatpush.msra.mxu0 %v1052
        %1066 = vmatpush.msra.mxu0 %v1051
        %1067 = vmatpush.msra.mxu0 %v1050
        %1068 = vmatpush.msra.mxu0 %v1049
        %1069 = vmatpush.msra.mxu0 %v1048
        %1070 = vmatpush.msra.mxu0 %v1047
        %1071 = vmatpush.msra.mxu0 %v1046
        %1072 = vmatpush.msra.mxu0 %v1045
        %1073 = vmatpush.msra.mxu0 %v1044
        %1074 = vmatpush.msra.mxu0 %v1043
        %1075 = vmatmul.f32.gmra.mxu0 %v1020
        %v1076 = vpop.f32.mrf.mxu0
        %v1077 = vadd.f32 0.0, %v1076
        %1078 = vmatmul.f32.gmra.mxu0 %v1023
        %v1079 = vpop.f32.mrf.mxu0
        %v1080 = vadd.f32 0.0, %v1079
        %1081 = vdwg.mxu0
        %1082 = vmatpush.msra.mxu0 %v1041
        %1083 = vmatpush.msra.mxu0 %v1040
        %1084 = vmatpush.msra.mxu0 %v1039
        %1085 = vmatpush.msra.mxu0 %v1038
        %1086 = vmatpush.msra.mxu0 %v1037
        %1087 = vmatpush.msra.mxu0 %v1036
        %1088 = vmatpush.msra.mxu0 %v1035
        %1089 = vmatpush.msra.mxu0 %v1034
        %1090 = vmatpush.msra.mxu0 %v1033
        %1091 = vmatpush.msra.mxu0 %v1032
        %1092 = vmatpush.msra.mxu0 %v1031
        %1093 = vmatpush.msra.mxu0 %v1030
        %1094 = vmatpush.msra.mxu0 %v1029
        %1095 = vmatpush.msra.mxu0 %v1028
        %1096 = vmatpush.msra.mxu0 %v1027
        %1097 = vmatpush.msra.mxu0 %v1026
        %1098 = vmatmul.f32.gmra.mxu0 %v1000
        %v1099 = vpop.f32.mrf.mxu0
        %v1100 = vadd.f32 %v1077, %v1099
        %1101 = vmatmul.f32.gmra.mxu0 %v1001
        %v1102 = vpop.f32.mrf.mxu0
        %v1103 = vadd.f32 %v1080, %v1102
        %1104 = vdwg.mxu0
        %s1105 = scalar_lea.vmem %s6, 1
        %v1106 = vld [vmem:[%s1105] sm:$0x1]
        %v1108 = vperm.slane %v1106, 0
        %v1110 = vadd.f32 %v1100, %v1108
        %v1111 = vadd.f32 %v1103, %v1108
        %v1112 = vmul.f32 %v1110, %v1110
        %v1113 = vmul.f32 %v1111, %v1111
        %1114 = vadd.xlane.f32.xlu0 %v1112
        %v1115 = vpop.xlane.xlu0 %1114
        %1116 = vadd.xlane.f32.xlu0 %v1113
        %v1117 = vpop.xlane.xlu0 %1116
        %v1118 = vmax.f32 %v1115, 1e-24
        %v1119 = vmax.f32 %v1117, 1e-24
        %v1120 = vrsqrt.pop %v1118
        %v1121 = vmul.f32 %v1120, %v1118
        %v1122 = vmul.f32 %v1121, %v1120
        %v1123 = vmul.f32 0.5, %v1122
        %v1124 = vsub.f32 1.5, %v1123
        %v1125 = vmul.f32 %v1120, %v1124
        %vm1126 = vweird.f32 %v1118
        %vm1127 = vweird.f32 %v1120
        %vm1128 = vmor %vm1126, %vm1127
        %v1129 = vsel %vm1128, %v1120, %v1125
        %v1130 = vrsqrt.pop %v1119
        %v1131 = vmul.f32 %v1130, %v1119
        %v1132 = vmul.f32 %v1131, %v1130
        %v1133 = vmul.f32 0.5, %v1132
        %v1134 = vsub.f32 1.5, %v1133
        %v1135 = vmul.f32 %v1130, %v1134
        %vm1136 = vweird.f32 %v1119
        %vm1137 = vweird.f32 %v1130
        %vm1138 = vmor %vm1136, %vm1137
        %v1139 = vsel %vm1138, %v1130, %v1135
        %v1140 = vmul.f32 %v1110, %v1129
        %v1141 = vmul.f32 %v1111, %v1139
        %v1142 = vmax.f32 %v1140, 0.0
        %v1143 = vmax.f32 %v1141, 0.0
        %s1144 = scalar_lea.vmem %s7, 1
        %v1145 = vld [vmem:[%s1144] sm:$0x1]
        %v1147 = vperm.slane %v1145, 0
        %v1149 = vmul.f32 %v1142, %v1147
        %v1150 = vmul.f32 %v1143, %v1147
        %s1151 = scalar_lea.vmem %s8, 1
        %v1152 = vld [vmem:[%s1151] sm:$0x1]
        %v1154 = vperm.slane %v1152, 0
        %v1156 = vadd.f32 %v1149, %v1154
        %v1157 = vadd.f32 %v1150, %v1154
        %v1158 = vadd.f32 %v1000, %v1156
        %v1159 = vadd.f32 %v1001, %v1157
        %v1160 = vadd.f32 %v1158, %v1159
        %v1161 = vrot.slane %v1160, 4
        %v1162 = vadd.f32 %v1160, %v1161
        %v1163 = vrot.slane %v1162, 2
        %v1164 = vadd.f32 %v1162, %v1163
        %v1165 = vrot.slane %v1164, 1
        %v1166 = vadd.f32 %v1164, %v1165
        %v1167 = vrcp.pop 16.0
        %v1168 = vmul.f32 16.0, %v1167
        %v1169 = vsub.f32 1.0, %v1168
        %v1170 = vmul.f32 %v1167, %v1169
        %v1171 = vadd.f32 %v1167, %v1170
        %vm1172 = vweird.f32 %v1167
        %v1173 = vsel %vm1172, %v1167, %v1171
        %v1174 = vmul.f32 %v1166, %v1173
        %v1175 = vld [vmem:[#allocation13] sm:$0xff]
        %v1176 = vld [vmem:[#allocation13 + $0x8] sm:$0xff]
        %v1177 = vld [vmem:[#allocation13 + $0x10] sm:$0xff]
        %v1178 = vld [vmem:[#allocation13 + $0x18] sm:$0xff]
        %v1179 = vld [vmem:[#allocation13 + $0x20] sm:$0xff]
        %v1180 = vld [vmem:[#allocation13 + $0x28] sm:$0xff]
        %v1181 = vld [vmem:[#allocation13 + $0x30] sm:$0xff]
        %v1182 = vld [vmem:[#allocation13 + $0x38] sm:$0xff]
        %v1183 = vld [vmem:[#allocation13 + $0x40] sm:$0xff]
        %v1184 = vld [vmem:[#allocation13 + $0x48] sm:$0xff]
        %v1185 = vld [vmem:[#allocation13 + $0x50] sm:$0xff]
        %v1186 = vld [vmem:[#allocation13 + $0x58] sm:$0xff]
        %v1187 = vld [vmem:[#allocation13 + $0x60] sm:$0xff]
        %v1188 = vld [vmem:[#allocation13 + $0x68] sm:$0xff]
        %v1189 = vld [vmem:[#allocation13 + $0x70] sm:$0xff]
        %v1190 = vld [vmem:[#allocation13 + $0x78] sm:$0xff]
        %v1191 = vld [vmem:[#allocation14] sm:$0x1]
        %1192 = vmatpush.msra.mxu0 %v1190
        %1193 = vmatpush.msra.mxu0 %v1189
        %1194 = vmatpush.msra.mxu0 %v1188
        %1195 = vmatpush.msra.mxu0 %v1187
        %1196 = vmatpush.msra.mxu0 %v1186
        %1197 = vmatpush.msra.mxu0 %v1185
        %1198 = vmatpush.msra.mxu0 %v1184
        %1199 = vmatpush.msra.mxu0 %v1183
        %1200 = vmatpush.msra.mxu0 %v1182
        %1201 = vmatpush.msra.mxu0 %v1181
        %1202 = vmatpush.msra.mxu0 %v1180
        %1203 = vmatpush.msra.mxu0 %v1179
        %1204 = vmatpush.msra.mxu0 %v1178
        %1205 = vmatpush.msra.mxu0 %v1177
        %1206 = vmatpush.msra.mxu0 %v1176
        %1207 = vmatpush.msra.mxu0 %v1175
        %1208 = vmatmul.f32.gmra.mxu0 %v1174
        %v1209 = vpop.f32.mrf.mxu0
        %v1210 = vadd.f32 %v1191, %v1209
        %1211 = vdwg.mxu0
        %v1212 = vmax.f32 %v1210, 0.0
        %v1213 = vld [vmem:[#allocation16] sm:$0xff]
        %v1214 = vld [vmem:[#allocation16 + $0x8] sm:$0xff]
        %v1215 = vld [vmem:[#allocation16 + $0x10] sm:$0xff]
        %v1216 = vld [vmem:[#allocation16 + $0x18] sm:$0xff]
        %v1217 = vld [vmem:[#allocation16 + $0x20] sm:$0xff]
        %v1218 = vld [vmem:[#allocation16 + $0x28] sm:$0xff]
        %v1219 = vld [vmem:[#allocation16 + $0x30] sm:$0xff]
        %v1220 = vld [vmem:[#allocation16 + $0x38] sm:$0xff]
        %v1221 = vld [vmem:[#allocation16 + $0x40] sm:$0xff]
        %v1222 = vld [vmem:[#allocation16 + $0x48] sm:$0xff]
        %v1223 = vld [vmem:[#allocation16 + $0x50] sm:$0xff]
        %v1224 = vld [vmem:[#allocation16 + $0x58] sm:$0xff]
        %v1225 = vld [vmem:[#allocation16 + $0x60] sm:$0xff]
        %v1226 = vld [vmem:[#allocation16 + $0x68] sm:$0xff]
        %v1227 = vld [vmem:[#allocation16 + $0x70] sm:$0xff]
        %v1228 = vld [vmem:[#allocation16 + $0x78] sm:$0xff]
        %v1229 = vld [vmem:[#allocation17] sm:$0x1]
        %1230 = vmatpush.msra.mxu0 %v1228
        %1231 = vmatpush.msra.mxu0 %v1227
        %1232 = vmatpush.msra.mxu0 %v1226
        %1233 = vmatpush.msra.mxu0 %v1225
        %1234 = vmatpush.msra.mxu0 %v1224
        %1235 = vmatpush.msra.mxu0 %v1223
        %1236 = vmatpush.msra.mxu0 %v1222
        %1237 = vmatpush.msra.mxu0 %v1221
        %1238 = vmatpush.msra.mxu0 %v1220
        %1239 = vmatpush.msra.mxu0 %v1219
        %1240 = vmatpush.msra.mxu0 %v1218
        %1241 = vmatpush.msra.mxu0 %v1217
        %1242 = vmatpush.msra.mxu0 %v1216
        %1243 = vmatpush.msra.mxu0 %v1215
        %1244 = vmatpush.msra.mxu0 %v1214
        %1245 = vmatpush.msra.mxu0 %v1213
        %1246 = vmatmul.f32.gmra.mxu0 %v1212
        %v1247 = vpop.f32.mrf.mxu0
        %v1248 = vadd.f32 %v1229, %v1247
        %1249 = vdwg.mxu0
        %v1250 = vmax.f32 %v1248, 0.0
        %v1251 = vld [vmem:[#allocation19] sm:$0xff]
        %v1252 = vld [vmem:[#allocation19 + $0x8] sm:$0xff]
        %v1253 = vld [vmem:[#allocation19 + $0x10] sm:$0xff]
        %v1254 = vld [vmem:[#allocation19 + $0x18] sm:$0xff]
        %v1255 = vld [vmem:[#allocation19 + $0x20] sm:$0xff]
        %v1256 = vld [vmem:[#allocation19 + $0x28] sm:$0xff]
        %v1257 = vld [vmem:[#allocation19 + $0x30] sm:$0xff]
        %v1258 = vld [vmem:[#allocation19 + $0x38] sm:$0xff]
        %v1259 = vld [vmem:[#allocation19 + $0x40] sm:$0xff]
        %v1260 = vld [vmem:[#allocation19 + $0x48] sm:$0xff]
        %v1261 = vld [vmem:[#allocation19 + $0x50] sm:$0xff]
        %v1262 = vld [vmem:[#allocation19 + $0x58] sm:$0xff]
        %v1263 = vld [vmem:[#allocation19 + $0x60] sm:$0xff]
        %v1264 = vld [vmem:[#allocation19 + $0x68] sm:$0xff]
        %v1265 = vld [vmem:[#allocation19 + $0x70] sm:$0xff]
        %v1266 = vld [vmem:[#allocation19 + $0x78] sm:$0xff]
        %v1267 = vld [vmem:[#allocation20] sm:$0x1]
        %1268 = vmatpush.msra.mxu0 %v1266
        %1269 = vmatpush.msra.mxu0 %v1265
        %1270 = vmatpush.msra.mxu0 %v1264
        %1271 = vmatpush.msra.mxu0 %v1263
        %1272 = vmatpush.msra.mxu0 %v1262
        %1273 = vmatpush.msra.mxu0 %v1261
        %1274 = vmatpush.msra.mxu0 %v1260
        %1275 = vmatpush.msra.mxu0 %v1259
        %1276 = vmatpush.msra.mxu0 %v1258
        %1277 = vmatpush.msra.mxu0 %v1257
        %1278 = vmatpush.msra.mxu0 %v1256
        %1279 = vmatpush.msra.mxu0 %v1255
        %1280 = vmatpush.msra.mxu0 %v1254
        %1281 = vmatpush.msra.mxu0 %v1253
        %1282 = vmatpush.msra.mxu0 %v1252
        %1283 = vmatpush.msra.mxu0 %v1251
        %1284 = vmatmul.f32.gmra.mxu0 %v1250
        %v1285 = vpop.f32.mrf.mxu0
        %v1286 = vadd.f32 %v1267, %v1285
        %1287 = vdwg.mxu0
        %1288 = vst [vmem:[%s712] sm:$0x1] %v1286
        %s1289 = sand.u32 %s373, 1
        %s1290 = scalar_lea.sflag [#allocation4], %s1289
        %s1291 = sand.u32 %s373, 1
        %s1292 = scalar_lea.vmem [#allocation22], %s1291
        // Predicated region
        $region129: #{graphnet_forward.1} parent=79 // pred_check
          %p1293 = pneg %p383
        $region130: #{graphnet_forward.1} parent=79 // pred_check_branch
          %1295 = sbr.rel (%p1293) target = $region132
        $region131: #{graphnet_forward.1} parent=79 // pred_region
          %1297 = vsyncadd %s1290, 0
          %s1298 = scalar_lea.hbm %s15, %s40
          %s1300 = sshll.u32 %s1292, 4
          %s1301 = int_to_ptr.vmem [resolvable:$true] %s1300
          %s1302 = sshll.u32 %s1298, 4
          %s1303 = int_to_ptr.hbm [resolvable:$true] %s1302
          %1305 = dma.vmem_to_hbm [thread:$0]  %s1301, 16, %s1303, %s1290
        $region132: #{graphnet_forward.1} parent=79 // pred_fallthru
          _
      $region80: #{graphnet_forward.1} parent=5 // pred_fallthru
        _
      %p1306 = scmp.le.s32.totalorder 2, %s35
      // Predicated region
      $region133: #{graphnet_forward.1} parent=5 // pred_check
        %p1307 = pneg %p1306
      $region134: #{graphnet_forward.1} parent=5 // pred_check_branch
        %1309 = sbr.rel (%p1307) target = $region136
      $region135: #{graphnet_forward.1} parent=5 // pred_region
        %s1310 = ssub.s32 %s35, 2
        // Predicated region
        $region137: #{graphnet_forward.1} parent=135 // pred_check
          %p1311 = pneg %p389
        $region138: #{graphnet_forward.1} parent=135 // pred_check_branch
          %1313 = sbr.rel (%p1311) target = $region140
        $region139: #{graphnet_forward.1} parent=135 // pred_region
          %s1314 = sand.u32 %s374, 1
          %s1315 = scalar_lea.sflag [#allocation4], %s1314
          %s1316 = sand.u32 %s374, 1
          %s1317 = scalar_lea.vmem [#allocation22], %s1316
          %1319 = dma.done %s1315, 16
        $region140: #{graphnet_forward.1} parent=135 // pred_fallthru
          _
      $region136: #{graphnet_forward.1} parent=5 // pred_fallthru
        _
    $region6: #{graphnet_forward.1} parent=1 // loop_footer
      %s39 = sadd.s32 1, %s35
    $region7: #{graphnet_forward.1} parent=1 // loop_footer_branch
      %34 = sbr.rel target = $region3
    $region8: #{graphnet_forward.1} parent=1 // loop_exit
      _
    %1320 = vsyncpa [#allocation3], 1
    %s1321 = scalar_lea.sflag [#allocation3], 1
    %1322 = vsyncpa %s1321, 1
    %1323 = vsyncpa [#allocation6], 1
    %s1324 = scalar_lea.sflag [#allocation6], 1
    %1325 = vsyncpa %s1324, 1
    %1326 = vsyncpa [#allocation9], 1
    %1327 = vsyncpa [#allocation12], 1
    %1328 = vsyncpa [#allocation15], 1
    %1329 = vsyncpa [#allocation18], 1
    %1330 = vsyncpa [#allocation21], 1
    %1331 = vsyncpa [#allocation4], 1
    %s1332 = scalar_lea.sflag [#allocation4], 1
    %1333 = vsyncpa %s1332, 1

</llo_original>
